<compile_context>
chip_gen: v6e
topology: v6e:2x2x1
jax: 0.10.0
libtpu: 0.0.40
codegen_flags: <defaults>
</compile_context>

<pallas_src>
import functools
import math

import jax
import jax.numpy as jnp
from jax import lax
from jax.experimental import pallas as pl
from jax.experimental.pallas import tpu as pltpu

LN_EPS = 1e-5  # nn.LayerNorm default


def _layernorm(x, w, b):
    mu = jnp.mean(x, axis=-1, keepdims=True)
    xc = x - mu
    var = jnp.mean(xc * xc, axis=-1, keepdims=True)
    inv = lax.rsqrt(var + LN_EPS)
    return xc * inv * w + b


def _erf(x, approx_recip=False):
    # Abramowitz & Stegun 7.1.26 polynomial (max abs error ~1.5e-7); exp/mul/add only.
    # TODO(synk): replace with lax.erf if/when erf_p lowering is guaranteed on this backend.
    a1, a2, a3, a4, a5 = 0.254829592, -0.284496736, 1.421413741, -1.453152027, 1.061405429
    p = 0.3275911
    s = jnp.where(x >= 0.0, 1.0, -1.0)
    ax = jnp.abs(x)
    denom = 1.0 + p * ax
    t = pl.reciprocal(denom, approx=True) if approx_recip else 1.0 / denom
    poly = ((((a5 * t + a4) * t + a3) * t + a2) * t + a1) * t
    return s * (1.0 - poly * jnp.exp(-ax * ax))


def _gelu(x, approx_recip=False):
    # nn.GELU() default (approximate='none'): 0.5*x*(1+erf(x/sqrt(2)))
    return 0.5 * x * (1.0 + _erf(x * (1.0 / math.sqrt(2.0)), approx_recip))


# ---------------------------------------------------------------------------
# Fused per-(batch-block, layer) kernel
# ---------------------------------------------------------------------------
def _transformer_layer_kernel(x_ref,
                              alnw_ref, alnb_ref, wqkv_ref, wo_ref, bo_ref,
                              flnw_ref, flnb_ref, w1_ref, b1_ref, w2_ref, b2_ref,
                              o_ref, *, heads, dim_head, matmul_dtype):
    # Layer 0: seed the resident activation.  The output block index only depends on the
    # batch grid axis, so the same VMEM buffer is revisited across the depth axis and the
    # activation never round-trips to HBM between layers.
    @pl.when(pl.program_id(1) == 0)
    def _():
        o_ref[...] = x_ref[...]

    TB, N, D = o_ref.shape
    inner = heads * dim_head
    cast = lambda t: t.astype(matmul_dtype)

    x = o_ref[...].astype(jnp.float32)                               # (TB, N, D) residual stream

    # ---------------- PreNorm multi-head self-attention ----------------
    xn = _layernorm(x, alnw_ref[...], alnb_ref[...])                 # (TB, N, D)
    xn2 = xn.reshape(TB * N, D)
    # Single lane-dense fused q/k/v projection; softmax scale already folded into q columns.
    qkv = jnp.dot(cast(xn2), cast(wqkv_ref[...]),
                  preferred_element_type=jnp.float32)                # (TB*N, 3*inner)
    q_all = qkv[:, :inner]
    k_all = qkv[:, inner:2 * inner]
    v_all = qkv[:, 2 * inner:]

    # Per-head scores / weighted sums (inherently per-head); the head slices are static
    # column views of the fused projection output.
    ctx_heads = []
    for h in range(heads):
        sl = slice(h * dim_head, (h + 1) * dim_head)
        qh = q_all[:, sl].reshape(TB, N, dim_head)
        kh = k_all[:, sl].reshape(TB, N, dim_head)
        vh = v_all[:, sl].reshape(TB, N, dim_head)
        dots = jnp.einsum('bnd,bmd->bnm', cast(qh), cast(kh),
                          preferred_element_type=jnp.float32)        # (TB, N, N)
        dots = dots - jnp.max(dots, axis=-1, keepdims=True)
        e = jnp.exp(dots)
        attn = e * pl.reciprocal(jnp.sum(e, axis=-1, keepdims=True), approx=True)
        ctx_heads.append(jnp.einsum('bnm,bmd->bnd', cast(attn), cast(vh),
                                    preferred_element_type=jnp.float32))
    ctx = ctx_heads[0] if heads == 1 else jnp.concatenate(ctx_heads, axis=-1)
    ctx = ctx.reshape(TB * N, inner)                                 # '(h d)'-packed context

    # Single (TB*N, inner) @ (inner, D) output projection (no per-head intermediate / sum).
    proj = jnp.dot(cast(ctx), cast(wo_ref[...]), preferred_element_type=jnp.float32)
    x = x + proj.reshape(TB, N, D) + bo_ref[...]                     # residual

    # ---------------- PreNorm MLP (GELU) ----------------
    xn = _layernorm(x, flnw_ref[...], flnb_ref[...]).reshape(TB * N, D)
    h1 = jnp.dot(cast(xn), cast(w1_ref[...]),
                 preferred_element_type=jnp.float32) + b1_ref[...]   # (TB*N, H)
    g = _gelu(h1, approx_recip=True)
    y = jnp.dot(cast(g), cast(w2_ref[...]),
                preferred_element_type=jnp.float32) + b2_ref[...]    # (TB*N, D)
    o_ref[...] = (x + y.reshape(TB, N, D)).astype(o_ref.dtype)       # residual


# ---------------------------------------------------------------------------
# pallas_call wrapper (single fused call for the whole depth loop)
# ---------------------------------------------------------------------------
def transformer_forward(x, sp, *, heads, dim_head, batch_block=8,
                        matmul_dtype=None, vmem_limit_bytes=48 * 1024 * 1024):
    B, N, D = x.shape
    depth = sp['wqkv'].shape[0]
    H = sp['w1'].shape[-1]
    inner = heads * dim_head
    if matmul_dtype is None:
        matmul_dtype = sp['wqkv'].dtype       # bf16-stored weights => bf16 MXU inputs

    # Batch blocking: TB rows share one weight fetch per layer.
    tb = min(batch_block, B)
    while B % tb:
        tb -= 1
    nb = B // tb

    kernel = functools.partial(_transformer_layer_kernel, heads=heads,
                               dim_head=dim_head, matmul_dtype=matmul_dtype)

    # Advisory cost hint for XLA scheduling around the fused custom call.
    flops = int(B * N * depth * (2 * D * 3 * inner      # fused qkv projection
                                 + 4 * N * inner        # scores + attn@v (all heads)
                                 + 2 * inner * D        # output projection
                                 + 4 * D * H))          # MLP up / down
    transcendentals = int(B * depth * (heads * N * N + N * H + 4 * N))
    wbytes = jnp.dtype(sp['wqkv'].dtype).itemsize
    layer_weight_bytes = (D * 3 * inner + inner * D + 2 * D * H) * wbytes + (6 * D + H) * 4
    bytes_accessed = int(2 * B * N * D * jnp.dtype(x.dtype).itemsize
                         + nb * depth * layer_weight_bytes)   # weights streamed once per block

    def wspec(*trailing):
        nz = len(trailing)
        return pl.BlockSpec((None,) + tuple(trailing),
                            lambda b, l, _nz=nz: (l,) + (0,) * _nz)

    act_spec = pl.BlockSpec((tb, N, D), lambda b, l: (b, 0, 0))

    return pl.pallas_call(
        kernel,
        out_shape=jax.ShapeDtypeStruct((B, N, D), x.dtype),
        grid=(nb, depth),
        in_specs=[
            act_spec,                                                # x (read at layer 0)
            wspec(1, D), wspec(1, D),                                # attn LayerNorm w, b
            wspec(D, 3 * inner),                                     # fused W_qkv (scale folded)
            wspec(inner, D),                                         # W_o ('(h d)' rows)
            wspec(1, D),                                             # b_o
            wspec(1, D), wspec(1, D),                                # ff LayerNorm w, b
            wspec(D, H), wspec(1, H),                                # W_1, b_1
            wspec(H, D), wspec(1, D),                                # W_2, b_2
        ],
        out_specs=act_spec,                                          # resident across depth
        input_output_aliases={0: 0},                                 # reuse x's HBM buffer
        compiler_params=pltpu.CompilerParams(
            dimension_semantics=("parallel", "arbitrary"),
            vmem_limit_bytes=vmem_limit_bytes),
        cost_estimate=pl.CostEstimate(flops=flops,
                                      transcendentals=transcendentals,
                                      bytes_accessed=bytes_accessed),
    )(x, sp['attn_ln_w'], sp['attn_ln_b'], sp['wqkv'], sp['wo'], sp['bo'],
      sp['ff_ln_w'], sp['ff_ln_b'], sp['w1'], sp['b1'], sp['w2'], sp['b2'])


# ---------------------------------------------------------------------------
# Parameters (deterministic synthetic init), one-time stacking, pure-JAX reference
# ---------------------------------------------------------------------------
def init_params(key, *, dim, depth, heads, dim_head, mlp_dim):
    # Matches the module for project_out=True configs (heads*dim_head != dim or heads>1).
    inner = heads * dim_head
    layers = []
    for _ in range(depth):
        keys = jax.random.split(key, 5)
        key = keys[0]
        p = {
            'attn_ln_w': jnp.ones((1, dim), jnp.float32),
            'attn_ln_b': jnp.zeros((1, dim), jnp.float32),
            'wqkv': 0.05 * jax.random.normal(keys[1], (dim, 3 * inner), jnp.float32),
            'wo': 0.05 * jax.random.normal(keys[2], (inner, dim), jnp.float32),
            'bo': 0.01 * jax.random.normal(keys[3], (1, dim), jnp.float32),
            'ff_ln_w': jnp.ones((1, dim), jnp.float32),
            'ff_ln_b': jnp.zeros((1, dim), jnp.float32),
            'w1': 0.05 * jax.random.normal(keys[4], (dim, mlp_dim), jnp.float32),
            'b1': jnp.zeros((1, mlp_dim), jnp.float32),
            'w2': 0.05 * jax.random.normal(jax.random.fold_in(keys[4], 1),
                                           (mlp_dim, dim), jnp.float32),
            'b2': jnp.zeros((1, dim), jnp.float32),
        }
        layers.append(p)
    return layers


def stack_params(layers, *, heads, dim_head, weight_dtype=jnp.float32):
    """One-time (outside the hot path) re-layout: fold the softmax scale into the q columns
    of the fused W_qkv, stack every per-layer tensor along a leading `depth` axis, and cast
    the matmul weights to `weight_dtype` (bf16 for the production path).  LayerNorm params
    and biases stay f32 (elementwise math is f32 on all generations)."""
    inner = heads * dim_head
    scale = dim_head ** (-0.5)

    rest = {k: [] for k in ['attn_ln_w', 'attn_ln_b', 'bo', 'ff_ln_w', 'ff_ln_b', 'b1', 'b2']}
    wqkv, wo, w1, w2 = [], [], [], []
    for p in layers:
        wqkv.append(p['wqkv'].at[:, :inner].multiply(scale))  # fold scale BEFORE any cast
        wo.append(p['wo'])
        w1.append(p['w1'])
        w2.append(p['w2'])
        for name in rest:
            rest[name].append(p[name])

    sp = {name: jnp.stack(vals, axis=0) for name, vals in rest.items()}
    sp['wqkv'] = jnp.stack(wqkv).astype(weight_dtype)
    sp['wo'] = jnp.stack(wo).astype(weight_dtype)
    sp['w1'] = jnp.stack(w1).astype(weight_dtype)
    sp['w2'] = jnp.stack(w2).astype(weight_dtype)
    return sp


def reference_forward(x, layers, *, heads, dim_head):
    B, N, D = x.shape
    inner = heads * dim_head
    scale = dim_head ** (-0.5)
    for p in layers:
        xn = _layernorm(x, p['attn_ln_w'], p['attn_ln_b'])
        qkv = jnp.einsum('bnd,df->bnf', xn, p['wqkv'])
        q, k, v = jnp.split(qkv, 3, axis=-1)
        q = q.reshape(B, N, heads, dim_head).transpose(0, 2, 1, 3)
        k = k.reshape(B, N, heads, dim_head).transpose(0, 2, 1, 3)
        v = v.reshape(B, N, heads, dim_head).transpose(0, 2, 1, 3)
        dots = jnp.einsum('bhnd,bhmd->bhnm', q, k) * scale
        attn = jax.nn.softmax(dots, axis=-1)
        out = jnp.einsum('bhnm,bhmd->bhnd', attn, v)
        out = out.transpose(0, 2, 1, 3).reshape(B, N, inner)
        x = jnp.einsum('bnf,fd->bnd', out, p['wo']) + p['bo'] + x
        xn = _layernorm(x, p['ff_ln_w'], p['ff_ln_b'])
        h = jnp.einsum('bnd,dh->bnh', xn, p['w1']) + p['b1']
        g = _gelu(h)
        x = jnp.einsum('bnh,hd->bnd', g, p['w2']) + p['b2'] + x
    return x


if __name__ == "__main__":
    # Small shapes consistent with the module: Transformer(dim=32, depth=2, heads=4,
    # dim_head=8, mlp_dim=64), input x of shape (B, N, dim) = (2, 8, 32).
    B, N, DIM = 2, 8, 32
    DEPTH, HEADS, DIM_HEAD, MLP_DIM = 2, 4, 8, 64

    key = jax.random.PRNGKey(0)
    kx, kp = jax.random.split(key)
    x = jax.random.normal(kx, (B, N, DIM), jnp.float32)
    layers = init_params(kp, dim=DIM, depth=DEPTH, heads=HEADS,
                         dim_head=DIM_HEAD, mlp_dim=MLP_DIM)
    ref = reference_forward(x, layers, heads=HEADS, dim_head=DIM_HEAD)

    # 1) f32 weight path: tight numerics check (only the EUP approximate reciprocals in the
    #    softmax normalization and GELU-erf differ from the reference).
    sp_f32 = stack_params(layers, heads=HEADS, dim_head=DIM_HEAD, weight_dtype=jnp.float32)
    out_f32 = transformer_forward(x + 0.0, sp_f32, heads=HEADS, dim_head=DIM_HEAD)
    out_f32 = jax.block_until_ready(out_f32)
    err_f32 = float(jnp.max(jnp.abs(out_f32 - ref)))
    assert err_f32 < 5e-3, f"f32 path mismatch vs reference: {err_f32}"

    # 2) bf16 weight + bf16 MXU-input path (production perf configuration): loose check.
    sp_bf16 = stack_params(layers, heads=HEADS, dim_head=DIM_HEAD, weight_dtype=jnp.bfloat16)
    out_bf16 = transformer_forward(x + 0.0, sp_bf16, heads=HEADS, dim_head=DIM_HEAD)
    out_bf16 = jax.block_until_ready(out_bf16)
    err_bf16 = float(jnp.max(jnp.abs(out_bf16 - ref)))
    assert err_bf16 < 5e-2, f"bf16 path mismatch vs reference: {err_bf16}"

    print("KERNEL_OK")
</pallas_src>

<mosaic_0001>
module attributes {stable_mosaic.version = 11 : i64} {
  func.func @_transformer_layer_kernel(%arg0: i32, %arg1: i32, %arg2: memref<2x8x32xf32, #tpu.memory_space<vmem>>, %arg3: memref<1x1x32xf32, #tpu.memory_space<vmem>>, %arg4: memref<1x1x32xf32, #tpu.memory_space<vmem>>, %arg5: memref<1x32x96xf32, #tpu.memory_space<vmem>>, %arg6: memref<1x32x32xf32, #tpu.memory_space<vmem>>, %arg7: memref<1x1x32xf32, #tpu.memory_space<vmem>>, %arg8: memref<1x1x32xf32, #tpu.memory_space<vmem>>, %arg9: memref<1x1x32xf32, #tpu.memory_space<vmem>>, %arg10: memref<1x32x64xf32, #tpu.memory_space<vmem>>, %arg11: memref<1x1x64xf32, #tpu.memory_space<vmem>>, %arg12: memref<1x64x32xf32, #tpu.memory_space<vmem>>, %arg13: memref<1x1x32xf32, #tpu.memory_space<vmem>>, %arg14: memref<2x8x32xf32, #tpu.memory_space<vmem>>) attributes {dimension_semantics = [#tpu.dimension_semantics<parallel>, #tpu.dimension_semantics<arbitrary>], iteration_bounds = array<i64: 1, 2>, scalar_prefetch = 0 : i64, scratch_operands = 0 : i64, tpu.core_type = #tpu.core_type<tc>, window_params = [{transform_indices = @transform_0, window_bounds = array<i64: 2, 8, 32>}, {transform_indices = @transform_1, window_bounds = array<i64: 1, 1, 32>}, {transform_indices = @transform_2, window_bounds = array<i64: 1, 1, 32>}, {transform_indices = @transform_3, window_bounds = array<i64: 1, 32, 96>}, {transform_indices = @transform_4, window_bounds = array<i64: 1, 32, 32>}, {transform_indices = @transform_5, window_bounds = array<i64: 1, 1, 32>}, {transform_indices = @transform_6, window_bounds = array<i64: 1, 1, 32>}, {transform_indices = @transform_7, window_bounds = array<i64: 1, 1, 32>}, {transform_indices = @transform_8, window_bounds = array<i64: 1, 32, 64>}, {transform_indices = @transform_9, window_bounds = array<i64: 1, 1, 64>}, {transform_indices = @transform_10, window_bounds = array<i64: 1, 64, 32>}, {transform_indices = @transform_11, window_bounds = array<i64: 1, 1, 32>}, {transform_indices = @transform_12, window_bounds = array<i64: 2, 8, 32>}]} {
    %c0_i32 = arith.constant 0 : i32
    %0 = arith.cmpi eq, %arg1, %c0_i32 : i32
    %1 = arith.extui %0 : i1 to i32
    %c0_i32_0 = arith.constant 0 : i32
    %2 = arith.cmpi ne, %1, %c0_i32_0 : i32
    scf.if %2 {
      %c0_83 = arith.constant 0 : index
      %c0_84 = arith.constant 0 : index
      %c0_85 = arith.constant 0 : index
      %205 = vector.load %arg2[%c0_83, %c0_84, %c0_85] : memref<2x8x32xf32, #tpu.memory_space<vmem>>, vector<2x8x32xf32>
      %c0_86 = arith.constant 0 : index
      %c0_87 = arith.constant 0 : index
      %c0_88 = arith.constant 0 : index
      %206 = vector.load %arg14[%c0_86, %c0_87, %c0_88] : memref<2x8x32xf32, #tpu.memory_space<vmem>>, vector<2x8x32xf32>
      tpu.vector_store %arg14[%c0_86, %c0_87, %c0_88], %205 {strides = array<i32>} : memref<2x8x32xf32, #tpu.memory_space<vmem>>, vector<2x8x32xf32>,
    } else {
    }
    %c0 = arith.constant 0 : index
    %c0_1 = arith.constant 0 : index
    %c0_2 = arith.constant 0 : index
    %3 = vector.load %arg14[%c0, %c0_1, %c0_2] : memref<2x8x32xf32, #tpu.memory_space<vmem>>, vector<2x8x32xf32>
    %c0_3 = arith.constant 0 : index
    %c0_4 = arith.constant 0 : index
    %c0_5 = arith.constant 0 : index
    %4 = vector.load %arg3[%c0_3, %c0_4, %c0_5] : memref<1x1x32xf32, #tpu.memory_space<vmem>>, vector<1x1x32xf32>
    %5 = vector.shape_cast %4 : vector<1x1x32xf32> to vector<1x32xf32>
    %c0_6 = arith.constant 0 : index
    %c0_7 = arith.constant 0 : index
    %c0_8 = arith.constant 0 : index
    %6 = vector.load %arg4[%c0_6, %c0_7, %c0_8] : memref<1x1x32xf32, #tpu.memory_space<vmem>>, vector<1x1x32xf32>
    %7 = vector.shape_cast %6 : vector<1x1x32xf32> to vector<1x32xf32>
    %cst = arith.constant dense<0.000000e+00> : vector<2x8xf32>
    %8 = vector.multi_reduction <add>, %3, %cst [2] : vector<2x8x32xf32> to vector<2x8xf32>
    %9 = vector.shape_cast %8 : vector<2x8xf32> to vector<2x8x1xf32>
    %cst_9 = arith.constant 3.200000e+01 : f32
    %10 = vector.broadcast %cst_9 : f32 to vector<2x8x1xf32>
    %11 = arith.divf %9, %10 : vector<2x8x1xf32>
    %12 = vector.broadcast %11 : vector<2x8x1xf32> to vector<2x8x32xf32>
    %13 = arith.subf %3, %12 : vector<2x8x32xf32>
    %14 = arith.mulf %13, %13 : vector<2x8x32xf32>
    %cst_10 = arith.constant dense<0.000000e+00> : vector<2x8xf32>
    %15 = vector.multi_reduction <add>, %14, %cst_10 [2] : vector<2x8x32xf32> to vector<2x8xf32>
    %16 = vector.shape_cast %15 : vector<2x8xf32> to vector<2x8x1xf32>
    %cst_11 = arith.constant 3.200000e+01 : f32
    %17 = vector.broadcast %cst_11 : f32 to vector<2x8x1xf32>
    %18 = arith.divf %16, %17 : vector<2x8x1xf32>
    %cst_12 = arith.constant 9.99999974E-6 : f32
    %19 = vector.broadcast %cst_12 : f32 to vector<2x8x1xf32>
    %20 = arith.addf %18, %19 : vector<2x8x1xf32>
    %21 = math.rsqrt %20 : vector<2x8x1xf32>
    %22 = vector.broadcast %21 : vector<2x8x1xf32> to vector<2x8x32xf32>
    %23 = arith.mulf %13, %22 : vector<2x8x32xf32>
    %24 = vector.shape_cast %5 : vector<1x32xf32> to vector<1x1x32xf32>
    %25 = vector.broadcast %24 : vector<1x1x32xf32> to vector<2x8x32xf32>
    %26 = arith.mulf %23, %25 : vector<2x8x32xf32>
    %27 = vector.shape_cast %7 : vector<1x32xf32> to vector<1x1x32xf32>
    %28 = vector.broadcast %27 : vector<1x1x32xf32> to vector<2x8x32xf32>
    %29 = arith.addf %26, %28 : vector<2x8x32xf32>
    %30 = vector.shape_cast %29 : vector<2x8x32xf32> to vector<16x32xf32>
    %c0_13 = arith.constant 0 : index
    %c0_14 = arith.constant 0 : index
    %c0_15 = arith.constant 0 : index
    %31 = vector.load %arg5[%c0_13, %c0_14, %c0_15] : memref<1x32x96xf32, #tpu.memory_space<vmem>>, vector<1x32x96xf32>
    %32 = vector.shape_cast %31 : vector<1x32x96xf32> to vector<32x96xf32>
    %cst_16 = arith.constant dense<0.000000e+00> : vector<16x96xf32>
    %33 = tpu.matmul %30, %32, %cst_16 {dimension_numbers = #tpu.dot_dimension_numbers<[1], [0], [0], [1], [0, 0, 1, 1], [], []>} : vector<16x32xf32>, vector<32x96xf32>, vector<16x96xf32> -> vector<16x96xf32>
    %34 = vector.extract_strided_slice %33 {offsets = [0, 0], sizes = [16, 32], strides = [1, 1]} : vector<16x96xf32> to vector<16x32xf32>
    %35 = vector.extract_strided_slice %33 {offsets = [0, 32], sizes = [16, 32], strides = [1, 1]} : vector<16x96xf32> to vector<16x32xf32>
    %36 = vector.extract_strided_slice %33 {offsets = [0, 64], sizes = [16, 32], strides = [1, 1]} : vector<16x96xf32> to vector<16x32xf32>
    %37 = vector.extract_strided_slice %34 {offsets = [0, 0], sizes = [16, 8], strides = [1, 1]} : vector<16x32xf32> to vector<16x8xf32>
    %38 = vector.shape_cast %37 : vector<16x8xf32> to vector<2x8x8xf32>
    %39 = vector.extract_strided_slice %35 {offsets = [0, 0], sizes = [16, 8], strides = [1, 1]} : vector<16x32xf32> to vector<16x8xf32>
    %40 = vector.shape_cast %39 : vector<16x8xf32> to vector<2x8x8xf32>
    %41 = vector.extract_strided_slice %36 {offsets = [0, 0], sizes = [16, 8], strides = [1, 1]} : vector<16x32xf32> to vector<16x8xf32>
    %42 = vector.shape_cast %41 : vector<16x8xf32> to vector<2x8x8xf32>
    "tpu.trace_start"() <{level = 10 : i32, message = "bnd,bmd->bnm"}> : () -> ()
    %cst_17 = arith.constant dense<0.000000e+00> : vector<2x8x8xf32>
    %43 = tpu.matmul %38, %40, %cst_17 {dimension_numbers = #tpu.dot_dimension_numbers<[2], [2], [1], [1], [0, 0, 0, 1, 1, 1], [0], [0]>} : vector<2x8x8xf32>, vector<2x8x8xf32>, vector<2x8x8xf32> -> vector<2x8x8xf32>
    "tpu.trace_stop"() : () -> ()
    %cst_18 = arith.constant dense<0xFF800000> : vector<2x8xf32>
    %44 = vector.multi_reduction <maximumf>, %43, %cst_18 [2] : vector<2x8x8xf32> to vector<2x8xf32>
    %45 = vector.shape_cast %44 : vector<2x8xf32> to vector<2x8x1xf32>
    %46 = vector.broadcast %45 : vector<2x8x1xf32> to vector<2x8x8xf32>
    %47 = arith.subf %43, %46 : vector<2x8x8xf32>
    %48 = math.exp %47 : vector<2x8x8xf32>
    %cst_19 = arith.constant dense<0.000000e+00> : vector<2x8xf32>
    %49 = vector.multi_reduction <add>, %48, %cst_19 [2] : vector<2x8x8xf32> to vector<2x8xf32>
    %50 = vector.shape_cast %49 : vector<2x8xf32> to vector<2x8x1xf32>
    %51 = tpu.reciprocal %50 {approx = true} : vector<2x8x1xf32> -> vector<2x8x1xf32>
    %52 = vector.broadcast %51 : vector<2x8x1xf32> to vector<2x8x8xf32>
    %53 = arith.mulf %48, %52 : vector<2x8x8xf32>
    "tpu.trace_start"() <{level = 10 : i32, message = "bnm,bmd->bnd"}> : () -> ()
    %cst_20 = arith.constant dense<0.000000e+00> : vector<2x8x8xf32>
    %54 = tpu.matmul %53, %42, %cst_20 {dimension_numbers = #tpu.dot_dimension_numbers<[2], [1], [1], [2], [0, 0, 0, 1, 1, 2], [0], [0]>} : vector<2x8x8xf32>, vector<2x8x8xf32>, vector<2x8x8xf32> -> vector<2x8x8xf32>
    "tpu.trace_stop"() : () -> ()
    %55 = vector.extract_strided_slice %34 {offsets = [0, 8], sizes = [16, 8], strides = [1, 1]} : vector<16x32xf32> to vector<16x8xf32>
    %56 = vector.shape_cast %55 : vector<16x8xf32> to vector<2x8x8xf32>
    %57 = vector.extract_strided_slice %35 {offsets = [0, 8], sizes = [16, 8], strides = [1, 1]} : vector<16x32xf32> to vector<16x8xf32>
    %58 = vector.shape_cast %57 : vector<16x8xf32> to vector<2x8x8xf32>
    %59 = vector.extract_strided_slice %36 {offsets = [0, 8], sizes = [16, 8], strides = [1, 1]} : vector<16x32xf32> to vector<16x8xf32>
    %60 = vector.shape_cast %59 : vector<16x8xf32> to vector<2x8x8xf32>
    "tpu.trace_start"() <{level = 10 : i32, message = "bnd,bmd->bnm"}> : () -> ()
    %cst_21 = arith.constant dense<0.000000e+00> : vector<2x8x8xf32>
    %61 = tpu.matmul %56, %58, %cst_21 {dimension_numbers = #tpu.dot_dimension_numbers<[2], [2], [1], [1], [0, 0, 0, 1, 1, 1], [0], [0]>} : vector<2x8x8xf32>, vector<2x8x8xf32>, vector<2x8x8xf32> -> vector<2x8x8xf32>
    "tpu.trace_stop"() : () -> ()
    %cst_22 = arith.constant dense<0xFF800000> : vector<2x8xf32>
    %62 = vector.multi_reduction <maximumf>, %61, %cst_22 [2] : vector<2x8x8xf32> to vector<2x8xf32>
    %63 = vector.shape_cast %62 : vector<2x8xf32> to vector<2x8x1xf32>
    %64 = vector.broadcast %63 : vector<2x8x1xf32> to vector<2x8x8xf32>
    %65 = arith.subf %61, %64 : vector<2x8x8xf32>
    %66 = math.exp %65 : vector<2x8x8xf32>
    %cst_23 = arith.constant dense<0.000000e+00> : vector<2x8xf32>
    %67 = vector.multi_reduction <add>, %66, %cst_23 [2] : vector<2x8x8xf32> to vector<2x8xf32>
    %68 = vector.shape_cast %67 : vector<2x8xf32> to vector<2x8x1xf32>
    %69 = tpu.reciprocal %68 {approx = true} : vector<2x8x1xf32> -> vector<2x8x1xf32>
    %70 = vector.broadcast %69 : vector<2x8x1xf32> to vector<2x8x8xf32>
    %71 = arith.mulf %66, %70 : vector<2x8x8xf32>
    "tpu.trace_start"() <{level = 10 : i32, message = "bnm,bmd->bnd"}> : () -> ()
    %cst_24 = arith.constant dense<0.000000e+00> : vector<2x8x8xf32>
    %72 = tpu.matmul %71, %60, %cst_24 {dimension_numbers = #tpu.dot_dimension_numbers<[2], [1], [1], [2], [0, 0, 0, 1, 1, 2], [0], [0]>} : vector<2x8x8xf32>, vector<2x8x8xf32>, vector<2x8x8xf32> -> vector<2x8x8xf32>
    "tpu.trace_stop"() : () -> ()
    %73 = vector.extract_strided_slice %34 {offsets = [0, 16], sizes = [16, 8], strides = [1, 1]} : vector<16x32xf32> to vector<16x8xf32>
    %74 = vector.shape_cast %73 : vector<16x8xf32> to vector<2x8x8xf32>
    %75 = vector.extract_strided_slice %35 {offsets = [0, 16], sizes = [16, 8], strides = [1, 1]} : vector<16x32xf32> to vector<16x8xf32>
    %76 = vector.shape_cast %75 : vector<16x8xf32> to vector<2x8x8xf32>
    %77 = vector.extract_strided_slice %36 {offsets = [0, 16], sizes = [16, 8], strides = [1, 1]} : vector<16x32xf32> to vector<16x8xf32>
    %78 = vector.shape_cast %77 : vector<16x8xf32> to vector<2x8x8xf32>
    "tpu.trace_start"() <{level = 10 : i32, message = "bnd,bmd->bnm"}> : () -> ()
    %cst_25 = arith.constant dense<0.000000e+00> : vector<2x8x8xf32>
    %79 = tpu.matmul %74, %76, %cst_25 {dimension_numbers = #tpu.dot_dimension_numbers<[2], [2], [1], [1], [0, 0, 0, 1, 1, 1], [0], [0]>} : vector<2x8x8xf32>, vector<2x8x8xf32>, vector<2x8x8xf32> -> vector<2x8x8xf32>
    "tpu.trace_stop"() : () -> ()
    %cst_26 = arith.constant dense<0xFF800000> : vector<2x8xf32>
    %80 = vector.multi_reduction <maximumf>, %79, %cst_26 [2] : vector<2x8x8xf32> to vector<2x8xf32>
    %81 = vector.shape_cast %80 : vector<2x8xf32> to vector<2x8x1xf32>
    %82 = vector.broadcast %81 : vector<2x8x1xf32> to vector<2x8x8xf32>
    %83 = arith.subf %79, %82 : vector<2x8x8xf32>
    %84 = math.exp %83 : vector<2x8x8xf32>
    %cst_27 = arith.constant dense<0.000000e+00> : vector<2x8xf32>
    %85 = vector.multi_reduction <add>, %84, %cst_27 [2] : vector<2x8x8xf32> to vector<2x8xf32>
    %86 = vector.shape_cast %85 : vector<2x8xf32> to vector<2x8x1xf32>
    %87 = tpu.reciprocal %86 {approx = true} : vector<2x8x1xf32> -> vector<2x8x1xf32>
    %88 = vector.broadcast %87 : vector<2x8x1xf32> to vector<2x8x8xf32>
    %89 = arith.mulf %84, %88 : vector<2x8x8xf32>
    "tpu.trace_start"() <{level = 10 : i32, message = "bnm,bmd->bnd"}> : () -> ()
    %cst_28 = arith.constant dense<0.000000e+00> : vector<2x8x8xf32>
    %90 = tpu.matmul %89, %78, %cst_28 {dimension_numbers = #tpu.dot_dimension_numbers<[2], [1], [1], [2], [0, 0, 0, 1, 1, 2], [0], [0]>} : vector<2x8x8xf32>, vector<2x8x8xf32>, vector<2x8x8xf32> -> vector<2x8x8xf32>
    "tpu.trace_stop"() : () -> ()
    %91 = vector.extract_strided_slice %34 {offsets = [0, 24], sizes = [16, 8], strides = [1, 1]} : vector<16x32xf32> to vector<16x8xf32>
    %92 = vector.shape_cast %91 : vector<16x8xf32> to vector<2x8x8xf32>
    %93 = vector.extract_strided_slice %35 {offsets = [0, 24], sizes = [16, 8], strides = [1, 1]} : vector<16x32xf32> to vector<16x8xf32>
    %94 = vector.shape_cast %93 : vector<16x8xf32> to vector<2x8x8xf32>
    %95 = vector.extract_strided_slice %36 {offsets = [0, 24], sizes = [16, 8], strides = [1, 1]} : vector<16x32xf32> to vector<16x8xf32>
    %96 = vector.shape_cast %95 : vector<16x8xf32> to vector<2x8x8xf32>
    "tpu.trace_start"() <{level = 10 : i32, message = "bnd,bmd->bnm"}> : () -> ()
    %cst_29 = arith.constant dense<0.000000e+00> : vector<2x8x8xf32>
    %97 = tpu.matmul %92, %94, %cst_29 {dimension_numbers = #tpu.dot_dimension_numbers<[2], [2], [1], [1], [0, 0, 0, 1, 1, 1], [0], [0]>} : vector<2x8x8xf32>, vector<2x8x8xf32>, vector<2x8x8xf32> -> vector<2x8x8xf32>
    "tpu.trace_stop"() : () -> ()
    %cst_30 = arith.constant dense<0xFF800000> : vector<2x8xf32>
    %98 = vector.multi_reduction <maximumf>, %97, %cst_30 [2] : vector<2x8x8xf32> to vector<2x8xf32>
    %99 = vector.shape_cast %98 : vector<2x8xf32> to vector<2x8x1xf32>
    %100 = vector.broadcast %99 : vector<2x8x1xf32> to vector<2x8x8xf32>
    %101 = arith.subf %97, %100 : vector<2x8x8xf32>
    %102 = math.exp %101 : vector<2x8x8xf32>
    %cst_31 = arith.constant dense<0.000000e+00> : vector<2x8xf32>
    %103 = vector.multi_reduction <add>, %102, %cst_31 [2] : vector<2x8x8xf32> to vector<2x8xf32>
    %104 = vector.shape_cast %103 : vector<2x8xf32> to vector<2x8x1xf32>
    %105 = tpu.reciprocal %104 {approx = true} : vector<2x8x1xf32> -> vector<2x8x1xf32>
    %106 = vector.broadcast %105 : vector<2x8x1xf32> to vector<2x8x8xf32>
    %107 = arith.mulf %102, %106 : vector<2x8x8xf32>
    "tpu.trace_start"() <{level = 10 : i32, message = "bnm,bmd->bnd"}> : () -> ()
    %cst_32 = arith.constant dense<0.000000e+00> : vector<2x8x8xf32>
    %108 = tpu.matmul %107, %96, %cst_32 {dimension_numbers = #tpu.dot_dimension_numbers<[2], [1], [1], [2], [0, 0, 0, 1, 1, 2], [0], [0]>} : vector<2x8x8xf32>, vector<2x8x8xf32>, vector<2x8x8xf32> -> vector<2x8x8xf32>
    "tpu.trace_stop"() : () -> ()
    %109 = tpu.concatenate %54, %72, %90, %108 in 2 : vector<2x8x8xf32>, vector<2x8x8xf32>, vector<2x8x8xf32>, vector<2x8x8xf32> -> vector<2x8x32xf32>
    %110 = vector.shape_cast %109 : vector<2x8x32xf32> to vector<16x32xf32>
    %c0_33 = arith.constant 0 : index
    %c0_34 = arith.constant 0 : index
    %c0_35 = arith.constant 0 : index
    %111 = vector.load %arg6[%c0_33, %c0_34, %c0_35] : memref<1x32x32xf32, #tpu.memory_space<vmem>>, vector<1x32x32xf32>
    %112 = vector.shape_cast %111 : vector<1x32x32xf32> to vector<32x32xf32>
    %cst_36 = arith.constant dense<0.000000e+00> : vector<16x32xf32>
    %113 = tpu.matmul %110, %112, %cst_36 {dimension_numbers = #tpu.dot_dimension_numbers<[1], [0], [0], [1], [0, 0, 1, 1], [], []>} : vector<16x32xf32>, vector<32x32xf32>, vector<16x32xf32> -> vector<16x32xf32>
    %114 = vector.shape_cast %113 : vector<16x32xf32> to vector<2x8x32xf32>
    %115 = arith.addf %3, %114 : vector<2x8x32xf32>
    %c0_37 = arith.constant 0 : index
    %c0_38 = arith.constant 0 : index
    %c0_39 = arith.constant 0 : index
    %116 = vector.load %arg7[%c0_37, %c0_38, %c0_39] : memref<1x1x32xf32, #tpu.memory_space<vmem>>, vector<1x1x32xf32>
    %117 = vector.shape_cast %116 : vector<1x1x32xf32> to vector<1x32xf32>
    %118 = vector.shape_cast %117 : vector<1x32xf32> to vector<1x1x32xf32>
    %119 = vector.broadcast %118 : vector<1x1x32xf32> to vector<2x8x32xf32>
    %120 = arith.addf %115, %119 : vector<2x8x32xf32>
    %c0_40 = arith.constant 0 : index
    %c0_41 = arith.constant 0 : index
    %c0_42 = arith.constant 0 : index
    %121 = vector.load %arg8[%c0_40, %c0_41, %c0_42] : memref<1x1x32xf32, #tpu.memory_space<vmem>>, vector<1x1x32xf32>
    %122 = vector.shape_cast %121 : vector<1x1x32xf32> to vector<1x32xf32>
    %c0_43 = arith.constant 0 : index
    %c0_44 = arith.constant 0 : index
    %c0_45 = arith.constant 0 : index
    %123 = vector.load %arg9[%c0_43, %c0_44, %c0_45] : memref<1x1x32xf32, #tpu.memory_space<vmem>>, vector<1x1x32xf32>
    %124 = vector.shape_cast %123 : vector<1x1x32xf32> to vector<1x32xf32>
    %cst_46 = arith.constant dense<0.000000e+00> : vector<2x8xf32>
    %125 = vector.multi_reduction <add>, %120, %cst_46 [2] : vector<2x8x32xf32> to vector<2x8xf32>
    %126 = vector.shape_cast %125 : vector<2x8xf32> to vector<2x8x1xf32>
    %cst_47 = arith.constant 3.200000e+01 : f32
    %127 = vector.broadcast %cst_47 : f32 to vector<2x8x1xf32>
    %128 = arith.divf %126, %127 : vector<2x8x1xf32>
    %129 = vector.broadcast %128 : vector<2x8x1xf32> to vector<2x8x32xf32>
    %130 = arith.subf %120, %129 : vector<2x8x32xf32>
    %131 = arith.mulf %130, %130 : vector<2x8x32xf32>
    %cst_48 = arith.constant dense<0.000000e+00> : vector<2x8xf32>
    %132 = vector.multi_reduction <add>, %131, %cst_48 [2] : vector<2x8x32xf32> to vector<2x8xf32>
    %133 = vector.shape_cast %132 : vector<2x8xf32> to vector<2x8x1xf32>
    %cst_49 = arith.constant 3.200000e+01 : f32
    %134 = vector.broadcast %cst_49 : f32 to vector<2x8x1xf32>
    %135 = arith.divf %133, %134 : vector<2x8x1xf32>
    %cst_50 = arith.constant 9.99999974E-6 : f32
    %136 = vector.broadcast %cst_50 : f32 to vector<2x8x1xf32>
    %137 = arith.addf %135, %136 : vector<2x8x1xf32>
    %138 = math.rsqrt %137 : vector<2x8x1xf32>
    %139 = vector.broadcast %138 : vector<2x8x1xf32> to vector<2x8x32xf32>
    %140 = arith.mulf %130, %139 : vector<2x8x32xf32>
    %141 = vector.shape_cast %122 : vector<1x32xf32> to vector<1x1x32xf32>
    %142 = vector.broadcast %141 : vector<1x1x32xf32> to vector<2x8x32xf32>
    %143 = arith.mulf %140, %142 : vector<2x8x32xf32>
    %144 = vector.shape_cast %124 : vector<1x32xf32> to vector<1x1x32xf32>
    %145 = vector.broadcast %144 : vector<1x1x32xf32> to vector<2x8x32xf32>
    %146 = arith.addf %143, %145 : vector<2x8x32xf32>
    %147 = vector.shape_cast %146 : vector<2x8x32xf32> to vector<16x32xf32>
    %c0_51 = arith.constant 0 : index
    %c0_52 = arith.constant 0 : index
    %c0_53 = arith.constant 0 : index
    %148 = vector.load %arg10[%c0_51, %c0_52, %c0_53] : memref<1x32x64xf32, #tpu.memory_space<vmem>>, vector<1x32x64xf32>
    %149 = vector.shape_cast %148 : vector<1x32x64xf32> to vector<32x64xf32>
    %cst_54 = arith.constant dense<0.000000e+00> : vector<16x64xf32>
    %150 = tpu.matmul %147, %149, %cst_54 {dimension_numbers = #tpu.dot_dimension_numbers<[1], [0], [0], [1], [0, 0, 1, 1], [], []>} : vector<16x32xf32>, vector<32x64xf32>, vector<16x64xf32> -> vector<16x64xf32>
    %c0_55 = arith.constant 0 : index
    %c0_56 = arith.constant 0 : index
    %c0_57 = arith.constant 0 : index
    %151 = vector.load %arg11[%c0_55, %c0_56, %c0_57] : memref<1x1x64xf32, #tpu.memory_space<vmem>>, vector<1x1x64xf32>
    %152 = vector.shape_cast %151 : vector<1x1x64xf32> to vector<1x64xf32>
    %153 = vector.broadcast %152 : vector<1x64xf32> to vector<16x64xf32>
    %154 = arith.addf %150, %153 : vector<16x64xf32>
    %cst_58 = arith.constant 5.000000e-01 : f32
    %155 = vector.broadcast %cst_58 : f32 to vector<16x64xf32>
    %156 = arith.mulf %155, %154 : vector<16x64xf32>
    %cst_59 = arith.constant 0.707106769 : f32
    %157 = vector.broadcast %cst_59 : f32 to vector<16x64xf32>
    %158 = arith.mulf %154, %157 : vector<16x64xf32>
    %cst_60 = arith.constant 0.000000e+00 : f32
    %159 = vector.broadcast %cst_60 : f32 to vector<16x64xf32>
    %160 = arith.cmpf oge, %158, %159 : vector<16x64xf32>
    %cst_61 = arith.constant 1.000000e+00 : f32
    %cst_62 = arith.constant -1.000000e+00 : f32
    %161 = vector.broadcast %cst_61 : f32 to vector<16x64xf32>
    %162 = vector.broadcast %cst_62 : f32 to vector<16x64xf32>
    %163 = arith.select %160, %161, %162 : vector<16x64xi1>, vector<16x64xf32>
    %164 = math.absf %158 : vector<16x64xf32>
    %cst_63 = arith.constant 0.327591091 : f32
    %165 = vector.broadcast %cst_63 : f32 to vector<16x64xf32>
    %166 = arith.mulf %165, %164 : vector<16x64xf32>
    %cst_64 = arith.constant 1.000000e+00 : f32
    %167 = vector.broadcast %cst_64 : f32 to vector<16x64xf32>
    %168 = arith.addf %167, %166 : vector<16x64xf32>
    %169 = tpu.reciprocal %168 {approx = true} : vector<16x64xf32> -> vector<16x64xf32>
    %cst_65 = arith.constant 1.06140542 : f32
    %170 = vector.broadcast %cst_65 : f32 to vector<16x64xf32>
    %171 = arith.mulf %170, %169 : vector<16x64xf32>
    %cst_66 = arith.constant -1.45315206 : f32
    %172 = vector.broadcast %cst_66 : f32 to vector<16x64xf32>
    %173 = arith.addf %171, %172 : vector<16x64xf32>
    %174 = arith.mulf %173, %169 : vector<16x64xf32>
    %cst_67 = arith.constant 1.42141378 : f32
    %175 = vector.broadcast %cst_67 : f32 to vector<16x64xf32>
    %176 = arith.addf %174, %175 : vector<16x64xf32>
    %177 = arith.mulf %176, %169 : vector<16x64xf32>
    %cst_68 = arith.constant -0.284496725 : f32
    %178 = vector.broadcast %cst_68 : f32 to vector<16x64xf32>
    %179 = arith.addf %177, %178 : vector<16x64xf32>
    %180 = arith.mulf %179, %169 : vector<16x64xf32>
    %cst_69 = arith.constant 0.254829586 : f32
    %181 = vector.broadcast %cst_69 : f32 to vector<16x64xf32>
    %182 = arith.addf %180, %181 : vector<16x64xf32>
    %183 = arith.mulf %182, %169 : vector<16x64xf32>
    %cst_70 = arith.constant 0.000000e+00 : f32
    %184 = vector.broadcast %cst_70 : f32 to vector<16x64xf32>
    %185 = arith.subf %184, %164 : vector<16x64xf32>
    %186 = arith.mulf %185, %164 : vector<16x64xf32>
    %187 = math.exp %186 : vector<16x64xf32>
    %188 = arith.mulf %183, %187 : vector<16x64xf32>
    %cst_71 = arith.constant 1.000000e+00 : f32
    %189 = vector.broadcast %cst_71 : f32 to vector<16x64xf32>
    %190 = arith.subf %189, %188 : vector<16x64xf32>
    %191 = arith.mulf %163, %190 : vector<16x64xf32>
    %cst_72 = arith.constant 1.000000e+00 : f32
    %192 = vector.broadcast %cst_72 : f32 to vector<16x64xf32>
    %193 = arith.addf %192, %191 : vector<16x64xf32>
    %194 = arith.mulf %156, %193 : vector<16x64xf32>
    %c0_73 = arith.constant 0 : index
    %c0_74 = arith.constant 0 : index
    %c0_75 = arith.constant 0 : index
    %195 = vector.load %arg12[%c0_73, %c0_74, %c0_75] : memref<1x64x32xf32, #tpu.memory_space<vmem>>, vector<1x64x32xf32>
    %196 = vector.shape_cast %195 : vector<1x64x32xf32> to vector<64x32xf32>
    %cst_76 = arith.constant dense<0.000000e+00> : vector<16x32xf32>
    %197 = tpu.matmul %194, %196, %cst_76 {dimension_numbers = #tpu.dot_dimension_numbers<[1], [0], [0], [1], [0, 0, 1, 1], [], []>} : vector<16x64xf32>, vector<64x32xf32>, vector<16x32xf32> -> vector<16x32xf32>
    %c0_77 = arith.constant 0 : index
    %c0_78 = arith.constant 0 : index
    %c0_79 = arith.constant 0 : index
    %198 = vector.load %arg13[%c0_77, %c0_78, %c0_79] : memref<1x1x32xf32, #tpu.memory_space<vmem>>, vector<1x1x32xf32>
    %199 = vector.shape_cast %198 : vector<1x1x32xf32> to vector<1x32xf32>
    %200 = vector.broadcast %199 : vector<1x32xf32> to vector<16x32xf32>
    %201 = arith.addf %197, %200 : vector<16x32xf32>
    %202 = vector.shape_cast %201 : vector<16x32xf32> to vector<2x8x32xf32>
    %203 = arith.addf %120, %202 : vector<2x8x32xf32>
    %c0_80 = arith.constant 0 : index
    %c0_81 = arith.constant 0 : index
    %c0_82 = arith.constant 0 : index
    %204 = vector.load %arg14[%c0_80, %c0_81, %c0_82] : memref<2x8x32xf32, #tpu.memory_space<vmem>>, vector<2x8x32xf32>
    tpu.vector_store %arg14[%c0_80, %c0_81, %c0_82], %203 {strides = array<i32>} : memref<2x8x32xf32, #tpu.memory_space<vmem>>, vector<2x8x32xf32>,
    return
  }
  func.func @transform_0(%arg0: i32, %arg1: i32) -> (i32, i32, i32) {
    %c0_i32 = arith.constant 0 : i32
    %c0_i32_0 = arith.constant 0 : i32
    %c0_i32_1 = arith.constant 0 : i32
    return %arg0, %c0_i32, %c0_i32_0 : i32, i32, i32
  }
  func.func @transform_1(%arg0: i32, %arg1: i32) -> (i32, i32, i32) {
    %c0_i32 = arith.constant 0 : i32
    %c0_i32_0 = arith.constant 0 : i32
    %c0_i32_1 = arith.constant 0 : i32
    return %arg1, %c0_i32, %c0_i32_0 : i32, i32, i32
  }
  func.func @transform_2(%arg0: i32, %arg1: i32) -> (i32, i32, i32) {
    %c0_i32 = arith.constant 0 : i32
    %c0_i32_0 = arith.constant 0 : i32
    %c0_i32_1 = arith.constant 0 : i32
    return %arg1, %c0_i32, %c0_i32_0 : i32, i32, i32
  }
  func.func @transform_3(%arg0: i32, %arg1: i32) -> (i32, i32, i32) {
    %c0_i32 = arith.constant 0 : i32
    %c0_i32_0 = arith.constant 0 : i32
    %c0_i32_1 = arith.constant 0 : i32
    return %arg1, %c0_i32, %c0_i32_0 : i32, i32, i32
  }
  func.func @transform_4(%arg0: i32, %arg1: i32) -> (i32, i32, i32) {
    %c0_i32 = arith.constant 0 : i32
    %c0_i32_0 = arith.constant 0 : i32
    %c0_i32_1 = arith.constant 0 : i32
    return %arg1, %c0_i32, %c0_i32_0 : i32, i32, i32
  }
  func.func @transform_5(%arg0: i32, %arg1: i32) -> (i32, i32, i32) {
    %c0_i32 = arith.constant 0 : i32
    %c0_i32_0 = arith.constant 0 : i32
    %c0_i32_1 = arith.constant 0 : i32
    return %arg1, %c0_i32, %c0_i32_0 : i32, i32, i32
  }
  func.func @transform_6(%arg0: i32, %arg1: i32) -> (i32, i32, i32) {
    %c0_i32 = arith.constant 0 : i32
    %c0_i32_0 = arith.constant 0 : i32
    %c0_i32_1 = arith.constant 0 : i32
    return %arg1, %c0_i32, %c0_i32_0 : i32, i32, i32
  }
  func.func @transform_7(%arg0: i32, %arg1: i32) -> (i32, i32, i32) {
    %c0_i32 = arith.constant 0 : i32
    %c0_i32_0 = arith.constant 0 : i32
    %c0_i32_1 = arith.constant 0 : i32
    return %arg1, %c0_i32, %c0_i32_0 : i32, i32, i32
  }
  func.func @transform_8(%arg0: i32, %arg1: i32) -> (i32, i32, i32) {
    %c0_i32 = arith.constant 0 : i32
    %c0_i32_0 = arith.constant 0 : i32
    %c0_i32_1 = arith.constant 0 : i32
    return %arg1, %c0_i32, %c0_i32_0 : i32, i32, i32
  }
  func.func @transform_9(%arg0: i32, %arg1: i32) -> (i32, i32, i32) {
    %c0_i32 = arith.constant 0 : i32
    %c0_i32_0 = arith.constant 0 : i32
    %c0_i32_1 = arith.constant 0 : i32
    return %arg1, %c0_i32, %c0_i32_0 : i32, i32, i32
  }
  func.func @transform_10(%arg0: i32, %arg1: i32) -> (i32, i32, i32) {
    %c0_i32 = arith.constant 0 : i32
    %c0_i32_0 = arith.constant 0 : i32
    %c0_i32_1 = arith.constant 0 : i32
    return %arg1, %c0_i32, %c0_i32_0 : i32, i32, i32
  }
  func.func @transform_11(%arg0: i32, %arg1: i32) -> (i32, i32, i32) {
    %c0_i32 = arith.constant 0 : i32
    %c0_i32_0 = arith.constant 0 : i32
    %c0_i32_1 = arith.constant 0 : i32
    return %arg1, %c0_i32, %c0_i32_0 : i32, i32, i32
  }
  func.func @transform_12(%arg0: i32, %arg1: i32) -> (i32, i32, i32) {
    %c0_i32 = arith.constant 0 : i32
    %c0_i32_0 = arith.constant 0 : i32
    %c0_i32_1 = arith.constant 0 : i32
    return %arg0, %c0_i32, %c0_i32_0 : i32, i32, i32
  }
}

</mosaic_0001>

<llo_original>
// kernel: tpu_custom_call.1
$region0: #{tpu_custom_call.1}
  #allocation0 [shape = 'u32[]', space=smem, size = 0x4, offset = 0x4, fixed_abs, tag = 'smem constant byte address 0x4 - core index']
  #allocation1 [shape = 'u32[144,128]{1,0:T(1,128)}', space=vmem, size = 0x12000, scoped, tag = 'internal scratch']
  %s0 = inlined_call_operand.hbm [shape: f32[2,8,32], index: 0, kind: input, shape index: {}, may-alias: {0,12}]
  %s1 = inlined_call_operand.vmem [shape: f32[2,1,32], index: 1, kind: input, shape index: {}]
  %s2 = inlined_call_operand.vmem [shape: f32[2,1,32], index: 2, kind: input, shape index: {}]
  %s3 = inlined_call_operand.vmem [shape: f32[2,32,96], index: 3, kind: input, shape index: {}]
  %s4 = inlined_call_operand.vmem [shape: f32[2,32,32], index: 4, kind: input, shape index: {}]
  %s5 = inlined_call_operand.vmem [shape: f32[2,1,32], index: 5, kind: input, shape index: {}]
  %s6 = inlined_call_operand.vmem [shape: f32[2,1,32], index: 6, kind: input, shape index: {}]
  %s7 = inlined_call_operand.vmem [shape: f32[2,1,32], index: 7, kind: input, shape index: {}]
  %s8 = inlined_call_operand.vmem [shape: f32[2,32,64], index: 8, kind: input, shape index: {}]
  %s9 = inlined_call_operand.vmem [shape: f32[2,1,64], index: 9, kind: input, shape index: {}]
  %s10 = inlined_call_operand.vmem [shape: f32[2,64,32], index: 10, kind: input, shape index: {}]
  %s11 = inlined_call_operand.vmem [shape: f32[2,1,32], index: 11, kind: input, shape index: {}]
  %s12 = inlined_call_operand.hbm [shape: f32[2,8,32], index: 12, kind: output, shape index: {}, may-alias: {0,12}]
  %s13 = sld [smem:[#allocation0]]
  $region89: #{tpu_custom_call.1} parent=0
    _
  %s15 = ssub.s32 1, %s13
  %s16 = scalar_select 0, %s15, %s13
  $region1: #{tpu_custom_call.1} parent=0
    #allocation2 [shape = 'u8[8192]{0}', space=vmem, size = 0x2000, scoped, tag = 'input window, operand 0, single buffered']
    #allocation3 [shape = 's32[2]{0}', space=sflag, size = 0x8, scoped, tag = 'scoped memory for tpu_custom_call.1']
    #allocation4 [shape = 's32[2]{0}', space=sflag, size = 0x8, scoped, tag = 'scoped memory for tpu_custom_call.1']
    #allocation5 [shape = 'u8[8192]{0}', space=vmem, size = 0x2000, scoped, tag = 'output window, operand 0, single buffered']
    %17 = vsyncpa [#allocation3], 0
    %18 = vsyncpa [#allocation4], 0
    loop: start=0, step=1, limit=4
    $region2: #{tpu_custom_call.1} parent=1 // loop_pre_header
      _
    $region3: #{tpu_custom_call.1} parent=1 // loop_header
      %s20 = sphi 0, %s24
      %p21 = scmp.ge.s32.totalorder %s20, 4
      %s27 = sphi 0, %s39
      %s28 = sphi 0, %s35
      %s29 = sphi 0, %s27
      %s30 = sphi 0, %s28
      %s31 = sphi 0, %s29
      %s32 = sphi 0, %s30
      %s42 = sphi 0, %s44
      %s45 = sphi 0, %s42
      %s46 = sphi 0, %s45
      %s62 = sphi 0, %s46
      %s68 = sphi 0, %s70
      %s71 = sphi 0, %s68
      %s72 = sphi 0, %s71
      %s88 = sphi 0, %s72
      %s94 = sphi 0, %s96
      %s97 = sphi 0, %s94
      %s98 = sphi 0, %s97
      %s114 = sphi 0, %s98
      %s120 = sphi 0, %s122
      %s123 = sphi 0, %s120
      %s124 = sphi 0, %s123
      %s140 = sphi 0, %s124
      %s146 = sphi 0, %s148
      %s149 = sphi 0, %s146
      %s150 = sphi 0, %s149
      %s166 = sphi 0, %s150
      %s172 = sphi 0, %s174
      %s175 = sphi 0, %s172
      %s176 = sphi 0, %s175
      %s192 = sphi 0, %s176
      %s198 = sphi 0, %s200
      %s201 = sphi 0, %s198
      %s202 = sphi 0, %s201
      %s218 = sphi 0, %s202
      %s224 = sphi 0, %s226
      %s227 = sphi 0, %s224
      %s228 = sphi 0, %s227
      %s244 = sphi 0, %s228
      %s250 = sphi 0, %s252
      %s253 = sphi 0, %s250
      %s254 = sphi 0, %s253
      %s270 = sphi 0, %s254
      %s276 = sphi 0, %s278
      %s279 = sphi 0, %s276
      %s280 = sphi 0, %s279
      %s296 = sphi 0, %s280
      %s302 = sphi 0, %s304
      %s305 = sphi 0, %s302
      %s306 = sphi 0, %s305
      %s322 = sphi 0, %s306
      %s328 = sphi 0, %s330
      %s331 = sphi 0, %s328
      %s332 = sphi 0, %s331
      %s348 = sphi 0, %s332
      %s354 = sphi 0, %s356
      %s357 = sphi 0, %s354
      %s358 = sphi 0, %s357
      %s374 = sphi 0, %s358
    $region4: #{tpu_custom_call.1} parent=1 // loop_header_branch
      %23 = sbr.rel (%p21) target = $region8
    $region5: #{tpu_custom_call.1} parent=1 // loop_body
      %s25 = ssub.s32 %s20, 1
      %s26 = ssub.s32 %s20, 2
      %s33 = sadd.s32 1, %s28
      %p34 = scmp.ge.s32.totalorder %s33, 2
      %s35 = scalar_select %p34, 0, %s33
      %s36 = sadd.s32 1, %s27
      %s37 = scalar_select %p34, %s36, %s27
      %p38 = scmp.ge.s32.totalorder %s37, 1
      %s39 = scalar_select %p38, 0, %s37
      %s40 = ssub.s32 %s27, %s39
      %p41 = scmp.eq.s32.totalorder %s40, 0
      %s43 = sadd.s32 %s42, 1
      %s44 = scalar_select %p41, %s42, %s43
      %p47 = pneg %p41
      %p48 = scmp.eq.s32.totalorder %s20, 1
      %p49 = por %p47, %p48
      %p50 = scmp.ne.s32.totalorder %s42, %s45
      %p51 = scmp.eq.s32.totalorder %s20, 0
      %p52 = por %p50, %p51
      %p53 = scmp.ne.s32.totalorder %s42, %s45
      %p54 = scmp.eq.s32.totalorder %s25, 1
      %p55 = por %p53, %p54
      %p56 = scmp.ne.s32.totalorder %s45, %s46
      %p57 = scmp.eq.s32.totalorder %s25, 0
      %p58 = por %p56, %p57
      %p59 = scmp.ne.s32.totalorder %s45, %s46
      %p60 = scmp.eq.s32.totalorder %s26, 1
      %p61 = por %p59, %p60
      %p63 = scmp.ne.s32.totalorder %s46, %s62
      %p64 = scmp.eq.s32.totalorder %s26, 0
      %p65 = por %p63, %p64
      %s66 = ssub.s32 %s28, %s35
      %p67 = scmp.eq.s32.totalorder %s66, 0
      %s69 = sadd.s32 %s68, 1
      %s70 = scalar_select %p67, %s68, %s69
      %p73 = pneg %p67
      %p74 = scmp.eq.s32.totalorder %s20, 1
      %p75 = por %p73, %p74
      %p76 = scmp.ne.s32.totalorder %s68, %s71
      %p77 = scmp.eq.s32.totalorder %s20, 0
      %p78 = por %p76, %p77
      %p79 = scmp.ne.s32.totalorder %s68, %s71
      %p80 = scmp.eq.s32.totalorder %s25, 1
      %p81 = por %p79, %p80
      %p82 = scmp.ne.s32.totalorder %s71, %s72
      %p83 = scmp.eq.s32.totalorder %s25, 0
      %p84 = por %p82, %p83
      %p85 = scmp.ne.s32.totalorder %s71, %s72
      %p86 = scmp.eq.s32.totalorder %s26, 1
      %p87 = por %p85, %p86
      %p89 = scmp.ne.s32.totalorder %s72, %s88
      %p90 = scmp.eq.s32.totalorder %s26, 0
      %p91 = por %p89, %p90
      %s92 = ssub.s32 %s28, %s35
      %p93 = scmp.eq.s32.totalorder %s92, 0
      %s95 = sadd.s32 %s94, 1
      %s96 = scalar_select %p93, %s94, %s95
      %p99 = pneg %p93
      %p100 = scmp.eq.s32.totalorder %s20, 1
      %p101 = por %p99, %p100
      %p102 = scmp.ne.s32.totalorder %s94, %s97
      %p103 = scmp.eq.s32.totalorder %s20, 0
      %p104 = por %p102, %p103
      %p105 = scmp.ne.s32.totalorder %s94, %s97
      %p106 = scmp.eq.s32.totalorder %s25, 1
      %p107 = por %p105, %p106
      %p108 = scmp.ne.s32.totalorder %s97, %s98
      %p109 = scmp.eq.s32.totalorder %s25, 0
      %p110 = por %p108, %p109
      %p111 = scmp.ne.s32.totalorder %s97, %s98
      %p112 = scmp.eq.s32.totalorder %s26, 1
      %p113 = por %p111, %p112
      %p115 = scmp.ne.s32.totalorder %s98, %s114
      %p116 = scmp.eq.s32.totalorder %s26, 0
      %p117 = por %p115, %p116
      %s118 = ssub.s32 %s28, %s35
      %p119 = scmp.eq.s32.totalorder %s118, 0
      %s121 = sadd.s32 %s120, 1
      %s122 = scalar_select %p119, %s120, %s121
      %p125 = pneg %p119
      %p126 = scmp.eq.s32.totalorder %s20, 1
      %p127 = por %p125, %p126
      %p128 = scmp.ne.s32.totalorder %s120, %s123
      %p129 = scmp.eq.s32.totalorder %s20, 0
      %p130 = por %p128, %p129
      %p131 = scmp.ne.s32.totalorder %s120, %s123
      %p132 = scmp.eq.s32.totalorder %s25, 1
      %p133 = por %p131, %p132
      %p134 = scmp.ne.s32.totalorder %s123, %s124
      %p135 = scmp.eq.s32.totalorder %s25, 0
      %p136 = por %p134, %p135
      %p137 = scmp.ne.s32.totalorder %s123, %s124
      %p138 = scmp.eq.s32.totalorder %s26, 1
      %p139 = por %p137, %p138
      %p141 = scmp.ne.s32.totalorder %s124, %s140
      %p142 = scmp.eq.s32.totalorder %s26, 0
      %p143 = por %p141, %p142
      %s144 = ssub.s32 %s28, %s35
      %p145 = scmp.eq.s32.totalorder %s144, 0
      %s147 = sadd.s32 %s146, 1
      %s148 = scalar_select %p145, %s146, %s147
      %p151 = pneg %p145
      %p152 = scmp.eq.s32.totalorder %s20, 1
      %p153 = por %p151, %p152
      %p154 = scmp.ne.s32.totalorder %s146, %s149
      %p155 = scmp.eq.s32.totalorder %s20, 0
      %p156 = por %p154, %p155
      %p157 = scmp.ne.s32.totalorder %s146, %s149
      %p158 = scmp.eq.s32.totalorder %s25, 1
      %p159 = por %p157, %p158
      %p160 = scmp.ne.s32.totalorder %s149, %s150
      %p161 = scmp.eq.s32.totalorder %s25, 0
      %p162 = por %p160, %p161
      %p163 = scmp.ne.s32.totalorder %s149, %s150
      %p164 = scmp.eq.s32.totalorder %s26, 1
      %p165 = por %p163, %p164
      %p167 = scmp.ne.s32.totalorder %s150, %s166
      %p168 = scmp.eq.s32.totalorder %s26, 0
      %p169 = por %p167, %p168
      %s170 = ssub.s32 %s28, %s35
      %p171 = scmp.eq.s32.totalorder %s170, 0
      %s173 = sadd.s32 %s172, 1
      %s174 = scalar_select %p171, %s172, %s173
      %p177 = pneg %p171
      %p178 = scmp.eq.s32.totalorder %s20, 1
      %p179 = por %p177, %p178
      %p180 = scmp.ne.s32.totalorder %s172, %s175
      %p181 = scmp.eq.s32.totalorder %s20, 0
      %p182 = por %p180, %p181
      %p183 = scmp.ne.s32.totalorder %s172, %s175
      %p184 = scmp.eq.s32.totalorder %s25, 1
      %p185 = por %p183, %p184
      %p186 = scmp.ne.s32.totalorder %s175, %s176
      %p187 = scmp.eq.s32.totalorder %s25, 0
      %p188 = por %p186, %p187
      %p189 = scmp.ne.s32.totalorder %s175, %s176
      %p190 = scmp.eq.s32.totalorder %s26, 1
      %p191 = por %p189, %p190
      %p193 = scmp.ne.s32.totalorder %s176, %s192
      %p194 = scmp.eq.s32.totalorder %s26, 0
      %p195 = por %p193, %p194
      %s196 = ssub.s32 %s28, %s35
      %p197 = scmp.eq.s32.totalorder %s196, 0
      %s199 = sadd.s32 %s198, 1
      %s200 = scalar_select %p197, %s198, %s199
      %p203 = pneg %p197
      %p204 = scmp.eq.s32.totalorder %s20, 1
      %p205 = por %p203, %p204
      %p206 = scmp.ne.s32.totalorder %s198, %s201
      %p207 = scmp.eq.s32.totalorder %s20, 0
      %p208 = por %p206, %p207
      %p209 = scmp.ne.s32.totalorder %s198, %s201
      %p210 = scmp.eq.s32.totalorder %s25, 1
      %p211 = por %p209, %p210
      %p212 = scmp.ne.s32.totalorder %s201, %s202
      %p213 = scmp.eq.s32.totalorder %s25, 0
      %p214 = por %p212, %p213
      %p215 = scmp.ne.s32.totalorder %s201, %s202
      %p216 = scmp.eq.s32.totalorder %s26, 1
      %p217 = por %p215, %p216
      %p219 = scmp.ne.s32.totalorder %s202, %s218
      %p220 = scmp.eq.s32.totalorder %s26, 0
      %p221 = por %p219, %p220
      %s222 = ssub.s32 %s28, %s35
      %p223 = scmp.eq.s32.totalorder %s222, 0
      %s225 = sadd.s32 %s224, 1
      %s226 = scalar_select %p223, %s224, %s225
      %p229 = pneg %p223
      %p230 = scmp.eq.s32.totalorder %s20, 1
      %p231 = por %p229, %p230
      %p232 = scmp.ne.s32.totalorder %s224, %s227
      %p233 = scmp.eq.s32.totalorder %s20, 0
      %p234 = por %p232, %p233
      %p235 = scmp.ne.s32.totalorder %s224, %s227
      %p236 = scmp.eq.s32.totalorder %s25, 1
      %p237 = por %p235, %p236
      %p238 = scmp.ne.s32.totalorder %s227, %s228
      %p239 = scmp.eq.s32.totalorder %s25, 0
      %p240 = por %p238, %p239
      %p241 = scmp.ne.s32.totalorder %s227, %s228
      %p242 = scmp.eq.s32.totalorder %s26, 1
      %p243 = por %p241, %p242
      %p245 = scmp.ne.s32.totalorder %s228, %s244
      %p246 = scmp.eq.s32.totalorder %s26, 0
      %p247 = por %p245, %p246
      %s248 = ssub.s32 %s28, %s35
      %p249 = scmp.eq.s32.totalorder %s248, 0
      %s251 = sadd.s32 %s250, 1
      %s252 = scalar_select %p249, %s250, %s251
      %p255 = pneg %p249
      %p256 = scmp.eq.s32.totalorder %s20, 1
      %p257 = por %p255, %p256
      %p258 = scmp.ne.s32.totalorder %s250, %s253
      %p259 = scmp.eq.s32.totalorder %s20, 0
      %p260 = por %p258, %p259
      %p261 = scmp.ne.s32.totalorder %s250, %s253
      %p262 = scmp.eq.s32.totalorder %s25, 1
      %p263 = por %p261, %p262
      %p264 = scmp.ne.s32.totalorder %s253, %s254
      %p265 = scmp.eq.s32.totalorder %s25, 0
      %p266 = por %p264, %p265
      %p267 = scmp.ne.s32.totalorder %s253, %s254
      %p268 = scmp.eq.s32.totalorder %s26, 1
      %p269 = por %p267, %p268
      %p271 = scmp.ne.s32.totalorder %s254, %s270
      %p272 = scmp.eq.s32.totalorder %s26, 0
      %p273 = por %p271, %p272
      %s274 = ssub.s32 %s28, %s35
      %p275 = scmp.eq.s32.totalorder %s274, 0
      %s277 = sadd.s32 %s276, 1
      %s278 = scalar_select %p275, %s276, %s277
      %p281 = pneg %p275
      %p282 = scmp.eq.s32.totalorder %s20, 1
      %p283 = por %p281, %p282
      %p284 = scmp.ne.s32.totalorder %s276, %s279
      %p285 = scmp.eq.s32.totalorder %s20, 0
      %p286 = por %p284, %p285
      %p287 = scmp.ne.s32.totalorder %s276, %s279
      %p288 = scmp.eq.s32.totalorder %s25, 1
      %p289 = por %p287, %p288
      %p290 = scmp.ne.s32.totalorder %s279, %s280
      %p291 = scmp.eq.s32.totalorder %s25, 0
      %p292 = por %p290, %p291
      %p293 = scmp.ne.s32.totalorder %s279, %s280
      %p294 = scmp.eq.s32.totalorder %s26, 1
      %p295 = por %p293, %p294
      %p297 = scmp.ne.s32.totalorder %s280, %s296
      %p298 = scmp.eq.s32.totalorder %s26, 0
      %p299 = por %p297, %p298
      %s300 = ssub.s32 %s28, %s35
      %p301 = scmp.eq.s32.totalorder %s300, 0
      %s303 = sadd.s32 %s302, 1
      %s304 = scalar_select %p301, %s302, %s303
      %p307 = pneg %p301
      %p308 = scmp.eq.s32.totalorder %s20, 1
      %p309 = por %p307, %p308
      %p310 = scmp.ne.s32.totalorder %s302, %s305
      %p311 = scmp.eq.s32.totalorder %s20, 0
      %p312 = por %p310, %p311
      %p313 = scmp.ne.s32.totalorder %s302, %s305
      %p314 = scmp.eq.s32.totalorder %s25, 1
      %p315 = por %p313, %p314
      %p316 = scmp.ne.s32.totalorder %s305, %s306
      %p317 = scmp.eq.s32.totalorder %s25, 0
      %p318 = por %p316, %p317
      %p319 = scmp.ne.s32.totalorder %s305, %s306
      %p320 = scmp.eq.s32.totalorder %s26, 1
      %p321 = por %p319, %p320
      %p323 = scmp.ne.s32.totalorder %s306, %s322
      %p324 = scmp.eq.s32.totalorder %s26, 0
      %p325 = por %p323, %p324
      %s326 = ssub.s32 %s28, %s35
      %p327 = scmp.eq.s32.totalorder %s326, 0
      %s329 = sadd.s32 %s328, 1
      %s330 = scalar_select %p327, %s328, %s329
      %p333 = pneg %p327
      %p334 = scmp.eq.s32.totalorder %s20, 1
      %p335 = por %p333, %p334
      %p336 = scmp.ne.s32.totalorder %s328, %s331
      %p337 = scmp.eq.s32.totalorder %s20, 0
      %p338 = por %p336, %p337
      %p339 = scmp.ne.s32.totalorder %s328, %s331
      %p340 = scmp.eq.s32.totalorder %s25, 1
      %p341 = por %p339, %p340
      %p342 = scmp.ne.s32.totalorder %s331, %s332
      %p343 = scmp.eq.s32.totalorder %s25, 0
      %p344 = por %p342, %p343
      %p345 = scmp.ne.s32.totalorder %s331, %s332
      %p346 = scmp.eq.s32.totalorder %s26, 1
      %p347 = por %p345, %p346
      %p349 = scmp.ne.s32.totalorder %s332, %s348
      %p350 = scmp.eq.s32.totalorder %s26, 0
      %p351 = por %p349, %p350
      %s352 = ssub.s32 %s27, %s39
      %p353 = scmp.eq.s32.totalorder %s352, 0
      %s355 = sadd.s32 %s354, 1
      %s356 = scalar_select %p353, %s354, %s355
      %p359 = pneg %p353
      %p360 = scmp.eq.s32.totalorder %s20, 1
      %p361 = por %p359, %p360
      %p362 = scmp.ne.s32.totalorder %s354, %s357
      %p363 = scmp.eq.s32.totalorder %s20, 0
      %p364 = por %p362, %p363
      %p365 = scmp.ne.s32.totalorder %s354, %s357
      %p366 = scmp.eq.s32.totalorder %s25, 1
      %p367 = por %p365, %p366
      %p368 = scmp.ne.s32.totalorder %s357, %s358
      %p369 = scmp.eq.s32.totalorder %s25, 0
      %p370 = por %p368, %p369
      %p371 = scmp.ne.s32.totalorder %s357, %s358
      %p372 = scmp.eq.s32.totalorder %s26, 1
      %p373 = por %p371, %p372
      %p375 = scmp.ne.s32.totalorder %s358, %s374
      %p376 = scmp.eq.s32.totalorder %s26, 0
      %p377 = por %p375, %p376
      %p378 = scmp.le.s32.totalorder 1, %s20
      %p379 = scmp.lt.s32.totalorder %s20, 3
      %p380 = pnand %p378, %p379
      %p381 = pneg %p380
      // Predicated region
      $region9: #{tpu_custom_call.1} parent=5 // pred_check
        _
      $region10: #{tpu_custom_call.1} parent=5 // pred_check_branch
        %383 = sbr.rel (%p380) target = $region12
      $region11: #{tpu_custom_call.1} parent=5 // pred_region
        %s384 = ssub.s32 %s20, 1
        // Predicated region
        $region13: #{tpu_custom_call.1} parent=11 // pred_check
          %p385 = pneg %p58
        $region14: #{tpu_custom_call.1} parent=11 // pred_check_branch
          %387 = sbr.rel (%p385) target = $region16
        $region15: #{tpu_custom_call.1} parent=11 // pred_region
          %s388 = smul.u32 2, %s29
          %s390 = ssub.s32 256, 256
          %391 = vsyncadd [#allocation3], %s390
          %s392 = smul.addr %s388, 128
          %s393 = scalar_lea.hbm %s0, %s392
          %s394 = sshll.u32 [#allocation2], 4
          %s395 = int_to_ptr.vmem [resolvable:$true] %s394
          %400 = dma.hbm_to_vmem [thread:$0]  %s393, 256, %s395, [#allocation3], 128, 128, 8
        $region16: #{tpu_custom_call.1} parent=11 // pred_fallthru
          _
      $region12: #{tpu_custom_call.1} parent=5 // pred_fallthru
        _
      %p401 = scmp.lt.s32.totalorder %s20, 2
      // Predicated region
      $region17: #{tpu_custom_call.1} parent=5 // pred_check
        %p402 = pneg %p401
      $region18: #{tpu_custom_call.1} parent=5 // pred_check_branch
        %404 = sbr.rel (%p402) target = $region20
      $region19: #{tpu_custom_call.1} parent=5 // pred_region
        // Predicated region
        $region21: #{tpu_custom_call.1} parent=19 // pred_check
          %p405 = pneg %p78
        $region22: #{tpu_custom_call.1} parent=19 // pred_check_branch
          %407 = sbr.rel (%p405) target = $region24
        $region23: #{tpu_custom_call.1} parent=19 // pred_region
          %p408 = scmp.lt.s32.totalorder %s28, 1
          %s409 = scalar_select %p408, %s28, 1
          %s410 = scalar_lea.vmem %s1, %s409
        $region24: #{tpu_custom_call.1} parent=19 // pred_fallthru
          _
        // Predicated region
        $region25: #{tpu_custom_call.1} parent=19 // pred_check
          %p411 = pneg %p104
        $region26: #{tpu_custom_call.1} parent=19 // pred_check_branch
          %413 = sbr.rel (%p411) target = $region28
        $region27: #{tpu_custom_call.1} parent=19 // pred_region
          %p414 = scmp.lt.s32.totalorder %s28, 1
          %s415 = scalar_select %p414, %s28, 1
          %s416 = scalar_lea.vmem %s2, %s415
        $region28: #{tpu_custom_call.1} parent=19 // pred_fallthru
          _
        // Predicated region
        $region29: #{tpu_custom_call.1} parent=19 // pred_check
          %p417 = pneg %p130
        $region30: #{tpu_custom_call.1} parent=19 // pred_check_branch
          %419 = sbr.rel (%p417) target = $region32
        $region31: #{tpu_custom_call.1} parent=19 // pred_region
          %p420 = scmp.lt.s32.totalorder %s28, 1
          %s421 = scalar_select %p420, %s28, 1
          %s422 = smul.addr %s421, 4
          %s423 = smul.addr %s422, 8
          %s424 = scalar_lea.vmem %s3, %s423
        $region32: #{tpu_custom_call.1} parent=19 // pred_fallthru
          _
        // Predicated region
        $region33: #{tpu_custom_call.1} parent=19 // pred_check
          %p425 = pneg %p156
        $region34: #{tpu_custom_call.1} parent=19 // pred_check_branch
          %427 = sbr.rel (%p425) target = $region36
        $region35: #{tpu_custom_call.1} parent=19 // pred_region
          %p428 = scmp.lt.s32.totalorder %s28, 1
          %s429 = scalar_select %p428, %s28, 1
          %s430 = smul.addr %s429, 4
          %s431 = smul.addr %s430, 8
          %s432 = scalar_lea.vmem %s4, %s431
        $region36: #{tpu_custom_call.1} parent=19 // pred_fallthru
          _
        // Predicated region
        $region37: #{tpu_custom_call.1} parent=19 // pred_check
          %p433 = pneg %p182
        $region38: #{tpu_custom_call.1} parent=19 // pred_check_branch
          %435 = sbr.rel (%p433) target = $region40
        $region39: #{tpu_custom_call.1} parent=19 // pred_region
          %p436 = scmp.lt.s32.totalorder %s28, 1
          %s437 = scalar_select %p436, %s28, 1
          %s438 = scalar_lea.vmem %s5, %s437
        $region40: #{tpu_custom_call.1} parent=19 // pred_fallthru
          _
        // Predicated region
        $region41: #{tpu_custom_call.1} parent=19 // pred_check
          %p439 = pneg %p208
        $region42: #{tpu_custom_call.1} parent=19 // pred_check_branch
          %441 = sbr.rel (%p439) target = $region44
        $region43: #{tpu_custom_call.1} parent=19 // pred_region
          %p442 = scmp.lt.s32.totalorder %s28, 1
          %s443 = scalar_select %p442, %s28, 1
          %s444 = scalar_lea.vmem %s6, %s443
        $region44: #{tpu_custom_call.1} parent=19 // pred_fallthru
          _
        // Predicated region
        $region45: #{tpu_custom_call.1} parent=19 // pred_check
          %p445 = pneg %p234
        $region46: #{tpu_custom_call.1} parent=19 // pred_check_branch
          %447 = sbr.rel (%p445) target = $region48
        $region47: #{tpu_custom_call.1} parent=19 // pred_region
          %p448 = scmp.lt.s32.totalorder %s28, 1
          %s449 = scalar_select %p448, %s28, 1
          %s450 = scalar_lea.vmem %s7, %s449
        $region48: #{tpu_custom_call.1} parent=19 // pred_fallthru
          _
        // Predicated region
        $region49: #{tpu_custom_call.1} parent=19 // pred_check
          %p451 = pneg %p260
        $region50: #{tpu_custom_call.1} parent=19 // pred_check_branch
          %453 = sbr.rel (%p451) target = $region52
        $region51: #{tpu_custom_call.1} parent=19 // pred_region
          %p454 = scmp.lt.s32.totalorder %s28, 1
          %s455 = scalar_select %p454, %s28, 1
          %s456 = smul.addr %s455, 4
          %s457 = smul.addr %s456, 8
          %s458 = scalar_lea.vmem %s8, %s457
        $region52: #{tpu_custom_call.1} parent=19 // pred_fallthru
          _
        // Predicated region
        $region53: #{tpu_custom_call.1} parent=19 // pred_check
          %p459 = pneg %p286
        $region54: #{tpu_custom_call.1} parent=19 // pred_check_branch
          %461 = sbr.rel (%p459) target = $region56
        $region55: #{tpu_custom_call.1} parent=19 // pred_region
          %p462 = scmp.lt.s32.totalorder %s28, 1
          %s463 = scalar_select %p462, %s28, 1
          %s464 = scalar_lea.vmem %s9, %s463
        $region56: #{tpu_custom_call.1} parent=19 // pred_fallthru
          _
        // Predicated region
        $region57: #{tpu_custom_call.1} parent=19 // pred_check
          %p465 = pneg %p312
        $region58: #{tpu_custom_call.1} parent=19 // pred_check_branch
          %467 = sbr.rel (%p465) target = $region60
        $region59: #{tpu_custom_call.1} parent=19 // pred_region
          %p468 = scmp.lt.s32.totalorder %s28, 1
          %s469 = scalar_select %p468, %s28, 1
          %s470 = smul.addr %s469, 8
          %s471 = smul.addr %s470, 8
          %s472 = scalar_lea.vmem %s10, %s471
        $region60: #{tpu_custom_call.1} parent=19 // pred_fallthru
          _
        // Predicated region
        $region61: #{tpu_custom_call.1} parent=19 // pred_check
          %p473 = pneg %p338
        $region62: #{tpu_custom_call.1} parent=19 // pred_check_branch
          %475 = sbr.rel (%p473) target = $region64
        $region63: #{tpu_custom_call.1} parent=19 // pred_region
          %p476 = scmp.lt.s32.totalorder %s28, 1
          %s477 = scalar_select %p476, %s28, 1
          %s478 = scalar_lea.vmem %s11, %s477
        $region64: #{tpu_custom_call.1} parent=19 // pred_fallthru
          _
      $region20: #{tpu_custom_call.1} parent=5 // pred_fallthru
        _
      %p479 = scmp.le.s32.totalorder 1, %s20
      %p480 = scmp.lt.s32.totalorder %s20, 3
      %p481 = pnand %p479, %p480
      %p482 = pneg %p481
      // Predicated region
      $region65: #{tpu_custom_call.1} parent=5 // pred_check
        _
      $region66: #{tpu_custom_call.1} parent=5 // pred_check_branch
        %484 = sbr.rel (%p481) target = $region68
      $region67: #{tpu_custom_call.1} parent=5 // pred_region
        %s485 = ssub.s32 %s20, 1
        // Predicated region
        $region69: #{tpu_custom_call.1} parent=67 // pred_check
          %p486 = pneg %p58
        $region70: #{tpu_custom_call.1} parent=67 // pred_check_branch
          %488 = sbr.rel (%p486) target = $region72
        $region71: #{tpu_custom_call.1} parent=67 // pred_region
          %489 = dma.done [#allocation3], 256
        $region72: #{tpu_custom_call.1} parent=67 // pred_fallthru
          _
        %p490 = pneg %p58
        %p491 = pneg %p55
        %p492 = scmp.lt.s32.totalorder %s30, 1
        %s493 = scalar_select %p492, %s30, 1
        %s494 = scalar_lea.vmem %s1, %s493
        %p495 = pneg %p84
        %p496 = pneg %p81
        %p497 = scmp.lt.s32.totalorder %s30, 1
        %s498 = scalar_select %p497, %s30, 1
        %s499 = scalar_lea.vmem %s2, %s498
        %p500 = pneg %p110
        %p501 = pneg %p107
        %p502 = scmp.lt.s32.totalorder %s30, 1
        %s503 = scalar_select %p502, %s30, 1
        %s504 = smul.addr %s503, 4
        %s505 = smul.addr %s504, 8
        %s506 = scalar_lea.vmem %s3, %s505
        %p507 = pneg %p136
        %p508 = pneg %p133
        %p509 = scmp.lt.s32.totalorder %s30, 1
        %s510 = scalar_select %p509, %s30, 1
        %s511 = smul.addr %s510, 4
        %s512 = smul.addr %s511, 8
        %s513 = scalar_lea.vmem %s4, %s512
        %p514 = pneg %p162
        %p515 = pneg %p159
        %p516 = scmp.lt.s32.totalorder %s30, 1
        %s517 = scalar_select %p516, %s30, 1
        %s518 = scalar_lea.vmem %s5, %s517
        %p519 = pneg %p188
        %p520 = pneg %p185
        %p521 = scmp.lt.s32.totalorder %s30, 1
        %s522 = scalar_select %p521, %s30, 1
        %s523 = scalar_lea.vmem %s6, %s522
        %p524 = pneg %p214
        %p525 = pneg %p211
        %p526 = scmp.lt.s32.totalorder %s30, 1
        %s527 = scalar_select %p526, %s30, 1
        %s528 = scalar_lea.vmem %s7, %s527
        %p529 = pneg %p240
        %p530 = pneg %p237
        %p531 = scmp.lt.s32.totalorder %s30, 1
        %s532 = scalar_select %p531, %s30, 1
        %s533 = smul.addr %s532, 4
        %s534 = smul.addr %s533, 8
        %s535 = scalar_lea.vmem %s8, %s534
        %p536 = pneg %p266
        %p537 = pneg %p263
        %p538 = scmp.lt.s32.totalorder %s30, 1
        %s539 = scalar_select %p538, %s30, 1
        %s540 = scalar_lea.vmem %s9, %s539
        %p541 = pneg %p292
        %p542 = pneg %p289
        %p543 = scmp.lt.s32.totalorder %s30, 1
        %s544 = scalar_select %p543, %s30, 1
        %s545 = smul.addr %s544, 8
        %s546 = smul.addr %s545, 8
        %s547 = scalar_lea.vmem %s10, %s546
        %p548 = pneg %p318
        %p549 = pneg %p315
        %p550 = scmp.lt.s32.totalorder %s30, 1
        %s551 = scalar_select %p550, %s30, 1
        %s552 = scalar_lea.vmem %s11, %s551
        %p553 = pneg %p344
        %p554 = pneg %p341
        %p555 = pneg %p370
        %p556 = pneg %p367
        %s557 = smul.u32 2, %s29
        %p558 = scmp.lt.s32.totalorder %s30, 1
        %s559 = scalar_select %p558, %s30, 1
        %s560 = scalar_lea.vmem %s1, %s559
        %p561 = scmp.lt.s32.totalorder %s30, 1
        %s562 = scalar_select %p561, %s30, 1
        %s563 = scalar_lea.vmem %s2, %s562
        %p564 = scmp.lt.s32.totalorder %s30, 1
        %s565 = scalar_select %p564, %s30, 1
        %s566 = smul.addr %s565, 4
        %s567 = smul.addr %s566, 8
        %s568 = scalar_lea.vmem %s3, %s567
        %p569 = scmp.lt.s32.totalorder %s30, 1
        %s570 = scalar_select %p569, %s30, 1
        %s571 = smul.addr %s570, 4
        %s572 = smul.addr %s571, 8
        %s573 = scalar_lea.vmem %s4, %s572
        %p574 = scmp.lt.s32.totalorder %s30, 1
        %s575 = scalar_select %p574, %s30, 1
        %s576 = scalar_lea.vmem %s5, %s575
        %p577 = scmp.lt.s32.totalorder %s30, 1
        %s578 = scalar_select %p577, %s30, 1
        %s579 = scalar_lea.vmem %s6, %s578
        %p580 = scmp.lt.s32.totalorder %s30, 1
        %s581 = scalar_select %p580, %s30, 1
        %s582 = scalar_lea.vmem %s7, %s581
        %p583 = scmp.lt.s32.totalorder %s30, 1
        %s584 = scalar_select %p583, %s30, 1
        %s585 = smul.addr %s584, 4
        %s586 = smul.addr %s585, 8
        %s587 = scalar_lea.vmem %s8, %s586
        %p588 = scmp.lt.s32.totalorder %s30, 1
        %s589 = scalar_select %p588, %s30, 1
        %s590 = scalar_lea.vmem %s9, %s589
        %p591 = scmp.lt.s32.totalorder %s30, 1
        %s592 = scalar_select %p591, %s30, 1
        %s593 = smul.addr %s592, 8
        %s594 = smul.addr %s593, 8
        %s595 = scalar_lea.vmem %s10, %s594
        %p596 = scmp.lt.s32.totalorder %s30, 1
        %s597 = scalar_select %p596, %s30, 1
        %s598 = scalar_lea.vmem %s11, %s597
        %s599 = smul.u32 2, %s29
        %p600 = scmp.eq.s32.totalorder %s30, 0
        // Predicated region
        $region73: #{tpu_custom_call.1} parent=67 // pred_check
          %p601 = pneg %p600
        $region74: #{tpu_custom_call.1} parent=67 // pred_check_branch
          %603 = sbr.rel (%p601) target = $region76
        $region75: #{tpu_custom_call.1} parent=67 // pred_region
          %v604 = vld [vmem:[#allocation2] sm:$0xff]
          %v605 = vld [vmem:[#allocation2 + $0x8] sm:$0xff]
          %vm606 = vcmask 261120
          %607 = vst.msk [vmem:[#allocation5] sm:$0xff] %vm606, %v604
          %608 = vst.msk [vmem:[#allocation5 + $0x8] sm:$0xff] %vm606, %v605
        $region76: #{tpu_custom_call.1} parent=67 // pred_fallthru
          _
        %v609 = vld [vmem:[#allocation5] sm:$0xff]
        %v610 = vld [vmem:[#allocation5 + $0x8] sm:$0xff]
        %v611 = vld [vmem:[%s560] sm:$0x1]
        %v612 = vld [vmem:[%s563] sm:$0x1]
        %vm613 = vcmask 261120
        %v614 = vsel %vm613, %v609, 0.0
        %615 = vadd.xlane.f32.xlu0 %v614
        %v616 = vpop.xlane.xlu0 %615
        %v617 = vsel %vm613, %v610, 0.0
        %618 = vadd.xlane.f32.xlu0 %v617
        %v619 = vpop.xlane.xlu0 %618
        %v620 = vrcp.pop 32.0
        %v621 = vmul.f32 %v616, %v620
        %v622 = vmul.f32 %v619, %v620
        %v623 = vsub.f32 %v609, %v621
        %v624 = vsub.f32 %v610, %v622
        %v625 = vmul.f32 %v623, %v623
        %v626 = vmul.f32 %v624, %v624
        %v627 = vsel %vm613, %v625, 0.0
        %628 = vadd.xlane.f32.xlu0 %v627
        %v629 = vpop.xlane.xlu0 %628
        %v630 = vsel %vm613, %v626, 0.0
        %631 = vadd.xlane.f32.xlu0 %v630
        %v632 = vpop.xlane.xlu0 %631
        %v633 = vmul.f32 %v629, %v620
        %v634 = vmul.f32 %v632, %v620
        %v635 = vadd.f32 %v633, 1e-05
        %v636 = vadd.f32 %v634, 1e-05
        %v637 = vrsqrt.pop %v635
        %v638 = vrsqrt.pop %v636
        %v639 = vmul.f32 %v623, %v637
        %v640 = vmul.f32 %v624, %v638
        %v642 = vlaneseq
        %v643 = vshrl.u32 %v642, 7
        %v644 = vsub.s32 0, %v643
        %v645 = vrot.slane %v611, %v644
        %v647 = vmul.f32 %v639, %v645
        %v648 = vmul.f32 %v640, %v645
        %v650 = vlaneseq
        %v651 = vshrl.u32 %v650, 7
        %v652 = vsub.s32 0, %v651
        %v653 = vrot.slane %v612, %v652
        %v655 = vadd.f32 %v647, %v653
        %v656 = vadd.f32 %v648, %v653
        %v657 = vld [vmem:[%s568] sm:$0xff]
        %v658 = vld [vmem:[%s568 + $0x8] sm:$0xff]
        %v659 = vld [vmem:[%s568 + $0x10] sm:$0xff]
        %v660 = vld [vmem:[%s568 + $0x18] sm:$0xff]
        %v662 = vsel %vm613, %v655, 0
        %v665 = vsel %vm613, %v656, 0
        %667 = vmatprep.subr.mxu0 0.0
        %668 = vmatpush1.msra.mxu0 0.0
        %669 = vmatprep.subr.mxu0 0.0
        %670 = vmatpush1.msra.mxu0 0.0
        %671 = vmatprep.subr.mxu0 0.0
        %672 = vmatpush1.msra.mxu0 0.0
        %673 = vmatprep.subr.mxu0 0.0
        %674 = vmatpush1.msra.mxu0 0.0
        %675 = vmatprep.subr.mxu0 0.0
        %676 = vmatpush1.msra.mxu0 0.0
        %677 = vmatprep.subr.mxu0 0.0
        %678 = vmatpush1.msra.mxu0 0.0
        %679 = vmatprep.subr.mxu0 0.0
        %680 = vmatpush1.msra.mxu0 0.0
        %681 = vmatprep.subr.mxu0 0.0
        %682 = vmatpush1.msra.mxu0 0.0
        %683 = vmatprep.subr.mxu0 0.0
        %684 = vmatpush1.msra.mxu0 0.0
        %685 = vmatprep.subr.mxu0 0.0
        %686 = vmatpush1.msra.mxu0 0.0
        %687 = vmatprep.subr.mxu0 0.0
        %688 = vmatpush1.msra.mxu0 0.0
        %689 = vmatprep.subr.mxu0 0.0
        %690 = vmatpush1.msra.mxu0 0.0
        %691 = vmatprep.subr.mxu0 0.0
        %692 = vmatpush1.msra.mxu0 %v660
        %693 = vmatprep.subr.mxu0 0.0
        %694 = vmatpush1.msra.mxu0 %v659
        %695 = vmatprep.subr.mxu0 0.0
        %696 = vmatpush1.msra.mxu0 %v658
        %697 = vmatprep.subr.mxu0 0.0
        %698 = vmatpush1.msra.mxu0 %v657
        %699 = vmatprep.subr.mxu0 0.0
        %700 = vmatpush2.msra.mxu0 0.0
        %701 = vmatprep.subr.mxu0 0.0
        %702 = vmatpush2.msra.mxu0 0.0
        %703 = vmatprep.subr.mxu0 0.0
        %704 = vmatpush2.msra.mxu0 0.0
        %705 = vmatprep.subr.mxu0 0.0
        %706 = vmatpush2.msra.mxu0 0.0
        %707 = vmatprep.subr.mxu0 0.0
        %708 = vmatpush2.msra.mxu0 0.0
        %709 = vmatprep.subr.mxu0 0.0
        %710 = vmatpush2.msra.mxu0 0.0
        %711 = vmatprep.subr.mxu0 0.0
        %712 = vmatpush2.msra.mxu0 0.0
        %713 = vmatprep.subr.mxu0 0.0
        %714 = vmatpush2.msra.mxu0 0.0
        %715 = vmatprep.subr.mxu0 0.0
        %716 = vmatpush2.msra.mxu0 0.0
        %717 = vmatprep.subr.mxu0 0.0
        %718 = vmatpush2.msra.mxu0 0.0
        %719 = vmatprep.subr.mxu0 0.0
        %720 = vmatpush2.msra.mxu0 0.0
        %721 = vmatprep.subr.mxu0 0.0
        %722 = vmatpush2.msra.mxu0 0.0
        %723 = vmatprep.subr.mxu0 0.0
        %724 = vmatpush2.msra.mxu0 0.0
        %725 = vmatprep.subr.mxu0 0.0
        %726 = vmatpush2.msra.mxu0 0.0
        %727 = vmatprep.subr.mxu0 0.0
        %728 = vmatpush2.msra.mxu0 0.0
        %729 = vmatprep.subr.mxu0 0.0
        %730 = vmatpush2.msra.mxu0 0.0
        %731 = vmatprep.mubr.f32.mxu0 0.0
        %732 = vmatmul.mubr.f32.gmra.mxu0 %v662
        %v733 = vpop.f32.mrf.mxu0
        %v734 = vadd.f32 0.0, %v733
        %v735 = vpop.f32.mrf.mxu0
        %736 = vmatprep.mubr.f32.mxu0 0.0
        %737 = vmatmul.mubr.f32.gmra.mxu0 %v665
        %v738 = vpop.f32.mrf.mxu0
        %v739 = vadd.f32 0.0, %v738
        %v740 = vpop.f32.mrf.mxu0
        %741 = vdwg.mxu0
        %743 = vrot.lane.b32.xlu0 %v734, 96
        %v744 = vpop.permute.xlu0 %743
        %vm745 = vcmask 64512
        %v746 = vsel %vm745, %v734, 0
        %v748 = vsel %vm745, %v744, 0
        %750 = vmatprep.subr.mxu0 0.0
        %751 = vmatpush1.xpose.msra.mxu0 0.0
        %752 = vmatprep.subr.mxu0 0.0
        %753 = vmatpush1.xpose.msra.mxu0 0.0
        %754 = vmatprep.subr.mxu0 0.0
        %755 = vmatpush1.xpose.msra.mxu0 0.0
        %756 = vmatprep.subr.mxu0 0.0
        %757 = vmatpush1.xpose.msra.mxu0 0.0
        %758 = vmatprep.subr.mxu0 0.0
        %759 = vmatpush1.xpose.msra.mxu0 0.0
        %760 = vmatprep.subr.mxu0 0.0
        %761 = vmatpush1.xpose.msra.mxu0 0.0
        %762 = vmatprep.subr.mxu0 0.0
        %763 = vmatpush1.xpose.msra.mxu0 0.0
        %764 = vmatprep.subr.mxu0 0.0
        %765 = vmatpush1.xpose.msra.mxu0 0.0
        %766 = vmatprep.subr.mxu0 0.0
        %767 = vmatpush1.xpose.msra.mxu0 0.0
        %768 = vmatprep.subr.mxu0 0.0
        %769 = vmatpush1.xpose.msra.mxu0 0.0
        %770 = vmatprep.subr.mxu0 0.0
        %771 = vmatpush1.xpose.msra.mxu0 0.0
        %772 = vmatprep.subr.mxu0 0.0
        %773 = vmatpush1.xpose.msra.mxu0 0.0
        %774 = vmatprep.subr.mxu0 0.0
        %775 = vmatpush1.xpose.msra.mxu0 0.0
        %776 = vmatprep.subr.mxu0 0.0
        %777 = vmatpush1.xpose.msra.mxu0 0.0
        %778 = vmatprep.subr.mxu0 0.0
        %779 = vmatpush1.xpose.msra.mxu0 0.0
        %780 = vmatprep.subr.mxu0 0.0
        %781 = vmatpush1.xpose.msra.mxu0 %v748
        %782 = vmatprep.subr.mxu0 0.0
        %783 = vmatpush2.xpose.msra.mxu0 0.0
        %784 = vmatprep.subr.mxu0 0.0
        %785 = vmatpush2.xpose.msra.mxu0 0.0
        %786 = vmatprep.subr.mxu0 0.0
        %787 = vmatpush2.xpose.msra.mxu0 0.0
        %788 = vmatprep.subr.mxu0 0.0
        %789 = vmatpush2.xpose.msra.mxu0 0.0
        %790 = vmatprep.subr.mxu0 0.0
        %791 = vmatpush2.xpose.msra.mxu0 0.0
        %792 = vmatprep.subr.mxu0 0.0
        %793 = vmatpush2.xpose.msra.mxu0 0.0
        %794 = vmatprep.subr.mxu0 0.0
        %795 = vmatpush2.xpose.msra.mxu0 0.0
        %796 = vmatprep.subr.mxu0 0.0
        %797 = vmatpush2.xpose.msra.mxu0 0.0
        %798 = vmatprep.subr.mxu0 0.0
        %799 = vmatpush2.xpose.msra.mxu0 0.0
        %800 = vmatprep.subr.mxu0 0.0
        %801 = vmatpush2.xpose.msra.mxu0 0.0
        %802 = vmatprep.subr.mxu0 0.0
        %803 = vmatpush2.xpose.msra.mxu0 0.0
        %804 = vmatprep.subr.mxu0 0.0
        %805 = vmatpush2.xpose.msra.mxu0 0.0
        %806 = vmatprep.subr.mxu0 0.0
        %807 = vmatpush2.xpose.msra.mxu0 0.0
        %808 = vmatprep.subr.mxu0 0.0
        %809 = vmatpush2.xpose.msra.mxu0 0.0
        %810 = vmatprep.subr.mxu0 0.0
        %811 = vmatpush2.xpose.msra.mxu0 0.0
        %812 = vmatprep.subr.mxu0 0.0
        %813 = vmatpush2.xpose.msra.mxu0 0.0
        %814 = vmatprep.mubr.f32.mxu0 0.0
        %815 = vmatmul.mubr.f32.gmra.mxu0 %v746
        %v816 = vpop.f32.mrf.mxu0
        %v817 = vadd.f32 0.0, %v816
        %v818 = vpop.f32.mrf.mxu0
        %819 = vdwg.mxu0
        %821 = vrot.lane.b32.xlu0 %v739, 96
        %v822 = vpop.permute.xlu0 %821
        %v823 = vsel %vm745, %v739, 0
        %v825 = vsel %vm745, %v822, 0
        %827 = vmatprep.subr.mxu0 0.0
        %828 = vmatpush1.xpose.msra.mxu0 0.0
        %829 = vmatprep.subr.mxu0 0.0
        %830 = vmatpush1.xpose.msra.mxu0 0.0
        %831 = vmatprep.subr.mxu0 0.0
        %832 = vmatpush1.xpose.msra.mxu0 0.0
        %833 = vmatprep.subr.mxu0 0.0
        %834 = vmatpush1.xpose.msra.mxu0 0.0
        %835 = vmatprep.subr.mxu0 0.0
        %836 = vmatpush1.xpose.msra.mxu0 0.0
        %837 = vmatprep.subr.mxu0 0.0
        %838 = vmatpush1.xpose.msra.mxu0 0.0
        %839 = vmatprep.subr.mxu0 0.0
        %840 = vmatpush1.xpose.msra.mxu0 0.0
        %841 = vmatprep.subr.mxu0 0.0
        %842 = vmatpush1.xpose.msra.mxu0 0.0
        %843 = vmatprep.subr.mxu0 0.0
        %844 = vmatpush1.xpose.msra.mxu0 0.0
        %845 = vmatprep.subr.mxu0 0.0
        %846 = vmatpush1.xpose.msra.mxu0 0.0
        %847 = vmatprep.subr.mxu0 0.0
        %848 = vmatpush1.xpose.msra.mxu0 0.0
        %849 = vmatprep.subr.mxu0 0.0
        %850 = vmatpush1.xpose.msra.mxu0 0.0
        %851 = vmatprep.subr.mxu0 0.0
        %852 = vmatpush1.xpose.msra.mxu0 0.0
        %853 = vmatprep.subr.mxu0 0.0
        %854 = vmatpush1.xpose.msra.mxu0 0.0
        %855 = vmatprep.subr.mxu0 0.0
        %856 = vmatpush1.xpose.msra.mxu0 0.0
        %857 = vmatprep.subr.mxu0 0.0
        %858 = vmatpush1.xpose.msra.mxu0 %v825
        %859 = vmatprep.subr.mxu0 0.0
        %860 = vmatpush2.xpose.msra.mxu0 0.0
        %861 = vmatprep.subr.mxu0 0.0
        %862 = vmatpush2.xpose.msra.mxu0 0.0
        %863 = vmatprep.subr.mxu0 0.0
        %864 = vmatpush2.xpose.msra.mxu0 0.0
        %865 = vmatprep.subr.mxu0 0.0
        %866 = vmatpush2.xpose.msra.mxu0 0.0
        %867 = vmatprep.subr.mxu0 0.0
        %868 = vmatpush2.xpose.msra.mxu0 0.0
        %869 = vmatprep.subr.mxu0 0.0
        %870 = vmatpush2.xpose.msra.mxu0 0.0
        %871 = vmatprep.subr.mxu0 0.0
        %872 = vmatpush2.xpose.msra.mxu0 0.0
        %873 = vmatprep.subr.mxu0 0.0
        %874 = vmatpush2.xpose.msra.mxu0 0.0
        %875 = vmatprep.subr.mxu0 0.0
        %876 = vmatpush2.xpose.msra.mxu0 0.0
        %877 = vmatprep.subr.mxu0 0.0
        %878 = vmatpush2.xpose.msra.mxu0 0.0
        %879 = vmatprep.subr.mxu0 0.0
        %880 = vmatpush2.xpose.msra.mxu0 0.0
        %881 = vmatprep.subr.mxu0 0.0
        %882 = vmatpush2.xpose.msra.mxu0 0.0
        %883 = vmatprep.subr.mxu0 0.0
        %884 = vmatpush2.xpose.msra.mxu0 0.0
        %885 = vmatprep.subr.mxu0 0.0
        %886 = vmatpush2.xpose.msra.mxu0 0.0
        %887 = vmatprep.subr.mxu0 0.0
        %888 = vmatpush2.xpose.msra.mxu0 0.0
        %889 = vmatprep.subr.mxu0 0.0
        %890 = vmatpush2.xpose.msra.mxu0 0.0
        %891 = vmatprep.mubr.f32.mxu0 0.0
        %892 = vmatmul.mubr.f32.gmra.mxu0 %v823
        %v893 = vpop.f32.mrf.mxu0
        %v894 = vadd.f32 0.0, %v893
        %v895 = vpop.f32.mrf.mxu0
        %896 = vdwg.mxu0
        %v897 = vsel %vm745, %v817, -inf
        %898 = vmax.xlane.f32.xlu0 %v897
        %v899 = vpop.xlane.xlu0 %898
        %v900 = vsel %vm745, %v894, -inf
        %901 = vmax.xlane.f32.xlu0 %v900
        %v902 = vpop.xlane.xlu0 %901
        %v903 = vsub.f32 %v817, %v899
        %v904 = vsub.f32 %v894, %v902
        %v905 = vmul.f32 %v903, 1.442695
        %v906 = vpow.pop %v905
        %v907 = vmul.f32 %v904, 1.442695
        %v908 = vpow.pop %v907
        %v909 = vsel %vm745, %v906, 0.0
        %910 = vadd.xlane.f32.xlu0 %v909
        %v911 = vpop.xlane.xlu0 %910
        %v912 = vsel %vm745, %v908, 0.0
        %913 = vadd.xlane.f32.xlu0 %v912
        %v914 = vpop.xlane.xlu0 %913
        %v915 = vrcp.pop %v911
        %v916 = vrcp.pop %v914
        %v917 = vmul.f32 %v906, %v915
        %v918 = vmul.f32 %v908, %v916
        %919 = vrot.lane.b32.xlu0 %v734, 64
        %v920 = vpop.permute.xlu0 %919
        %v923 = vsel %vm745, %v917, 0
        %925 = vmatprep.subr.mxu0 0.0
        %926 = vmatpush1.msra.mxu0 0.0
        %927 = vmatprep.subr.mxu0 0.0
        %928 = vmatpush1.msra.mxu0 0.0
        %929 = vmatprep.subr.mxu0 0.0
        %930 = vmatpush1.msra.mxu0 0.0
        %931 = vmatprep.subr.mxu0 0.0
        %932 = vmatpush1.msra.mxu0 0.0
        %933 = vmatprep.subr.mxu0 0.0
        %934 = vmatpush1.msra.mxu0 0.0
        %935 = vmatprep.subr.mxu0 0.0
        %936 = vmatpush1.msra.mxu0 0.0
        %937 = vmatprep.subr.mxu0 0.0
        %938 = vmatpush1.msra.mxu0 0.0
        %939 = vmatprep.subr.mxu0 0.0
        %940 = vmatpush1.msra.mxu0 0.0
        %941 = vmatprep.subr.mxu0 0.0
        %942 = vmatpush1.msra.mxu0 0.0
        %943 = vmatprep.subr.mxu0 0.0
        %944 = vmatpush1.msra.mxu0 0.0
        %945 = vmatprep.subr.mxu0 0.0
        %946 = vmatpush1.msra.mxu0 0.0
        %947 = vmatprep.subr.mxu0 0.0
        %948 = vmatpush1.msra.mxu0 0.0
        %949 = vmatprep.subr.mxu0 0.0
        %950 = vmatpush1.msra.mxu0 0.0
        %951 = vmatprep.subr.mxu0 0.0
        %952 = vmatpush1.msra.mxu0 0.0
        %953 = vmatprep.subr.mxu0 0.0
        %954 = vmatpush1.msra.mxu0 0.0
        %955 = vmatprep.subr.mxu0 0.0
        %956 = vmatpush1.msra.mxu0 %v920
        %957 = vmatprep.subr.mxu0 0.0
        %958 = vmatpush2.msra.mxu0 0.0
        %959 = vmatprep.subr.mxu0 0.0
        %960 = vmatpush2.msra.mxu0 0.0
        %961 = vmatprep.subr.mxu0 0.0
        %962 = vmatpush2.msra.mxu0 0.0
        %963 = vmatprep.subr.mxu0 0.0
        %964 = vmatpush2.msra.mxu0 0.0
        %965 = vmatprep.subr.mxu0 0.0
        %966 = vmatpush2.msra.mxu0 0.0
        %967 = vmatprep.subr.mxu0 0.0
        %968 = vmatpush2.msra.mxu0 0.0
        %969 = vmatprep.subr.mxu0 0.0
        %970 = vmatpush2.msra.mxu0 0.0
        %971 = vmatprep.subr.mxu0 0.0
        %972 = vmatpush2.msra.mxu0 0.0
        %973 = vmatprep.subr.mxu0 0.0
        %974 = vmatpush2.msra.mxu0 0.0
        %975 = vmatprep.subr.mxu0 0.0
        %976 = vmatpush2.msra.mxu0 0.0
        %977 = vmatprep.subr.mxu0 0.0
        %978 = vmatpush2.msra.mxu0 0.0
        %979 = vmatprep.subr.mxu0 0.0
        %980 = vmatpush2.msra.mxu0 0.0
        %981 = vmatprep.subr.mxu0 0.0
        %982 = vmatpush2.msra.mxu0 0.0
        %983 = vmatprep.subr.mxu0 0.0
        %984 = vmatpush2.msra.mxu0 0.0
        %985 = vmatprep.subr.mxu0 0.0
        %986 = vmatpush2.msra.mxu0 0.0
        %987 = vmatprep.subr.mxu0 0.0
        %988 = vmatpush2.msra.mxu0 0.0
        %989 = vmatprep.mubr.f32.mxu0 0.0
        %990 = vmatmul.mubr.f32.gmra.mxu0 %v923
        %v991 = vpop.f32.mrf.mxu0
        %v992 = vadd.f32 0.0, %v991
        %v993 = vpop.f32.mrf.mxu0
        %994 = vdwg.mxu0
        %995 = vrot.lane.b32.xlu0 %v739, 64
        %v996 = vpop.permute.xlu0 %995
        %v999 = vsel %vm745, %v918, 0
        %1001 = vmatprep.subr.mxu0 0.0
        %1002 = vmatpush1.msra.mxu0 0.0
        %1003 = vmatprep.subr.mxu0 0.0
        %1004 = vmatpush1.msra.mxu0 0.0
        %1005 = vmatprep.subr.mxu0 0.0
        %1006 = vmatpush1.msra.mxu0 0.0
        %1007 = vmatprep.subr.mxu0 0.0
        %1008 = vmatpush1.msra.mxu0 0.0
        %1009 = vmatprep.subr.mxu0 0.0
        %1010 = vmatpush1.msra.mxu0 0.0
        %1011 = vmatprep.subr.mxu0 0.0
        %1012 = vmatpush1.msra.mxu0 0.0
        %1013 = vmatprep.subr.mxu0 0.0
        %1014 = vmatpush1.msra.mxu0 0.0
        %1015 = vmatprep.subr.mxu0 0.0
        %1016 = vmatpush1.msra.mxu0 0.0
        %1017 = vmatprep.subr.mxu0 0.0
        %1018 = vmatpush1.msra.mxu0 0.0
        %1019 = vmatprep.subr.mxu0 0.0
        %1020 = vmatpush1.msra.mxu0 0.0
        %1021 = vmatprep.subr.mxu0 0.0
        %1022 = vmatpush1.msra.mxu0 0.0
        %1023 = vmatprep.subr.mxu0 0.0
        %1024 = vmatpush1.msra.mxu0 0.0
        %1025 = vmatprep.subr.mxu0 0.0
        %1026 = vmatpush1.msra.mxu0 0.0
        %1027 = vmatprep.subr.mxu0 0.0
        %1028 = vmatpush1.msra.mxu0 0.0
        %1029 = vmatprep.subr.mxu0 0.0
        %1030 = vmatpush1.msra.mxu0 0.0
        %1031 = vmatprep.subr.mxu0 0.0
        %1032 = vmatpush1.msra.mxu0 %v996
        %1033 = vmatprep.subr.mxu0 0.0
        %1034 = vmatpush2.msra.mxu0 0.0
        %1035 = vmatprep.subr.mxu0 0.0
        %1036 = vmatpush2.msra.mxu0 0.0
        %1037 = vmatprep.subr.mxu0 0.0
        %1038 = vmatpush2.msra.mxu0 0.0
        %1039 = vmatprep.subr.mxu0 0.0
        %1040 = vmatpush2.msra.mxu0 0.0
        %1041 = vmatprep.subr.mxu0 0.0
        %1042 = vmatpush2.msra.mxu0 0.0
        %1043 = vmatprep.subr.mxu0 0.0
        %1044 = vmatpush2.msra.mxu0 0.0
        %1045 = vmatprep.subr.mxu0 0.0
        %1046 = vmatpush2.msra.mxu0 0.0
        %1047 = vmatprep.subr.mxu0 0.0
        %1048 = vmatpush2.msra.mxu0 0.0
        %1049 = vmatprep.subr.mxu0 0.0
        %1050 = vmatpush2.msra.mxu0 0.0
        %1051 = vmatprep.subr.mxu0 0.0
        %1052 = vmatpush2.msra.mxu0 0.0
        %1053 = vmatprep.subr.mxu0 0.0
        %1054 = vmatpush2.msra.mxu0 0.0
        %1055 = vmatprep.subr.mxu0 0.0
        %1056 = vmatpush2.msra.mxu0 0.0
        %1057 = vmatprep.subr.mxu0 0.0
        %1058 = vmatpush2.msra.mxu0 0.0
        %1059 = vmatprep.subr.mxu0 0.0
        %1060 = vmatpush2.msra.mxu0 0.0
        %1061 = vmatprep.subr.mxu0 0.0
        %1062 = vmatpush2.msra.mxu0 0.0
        %1063 = vmatprep.subr.mxu0 0.0
        %1064 = vmatpush2.msra.mxu0 0.0
        %1065 = vmatprep.mubr.f32.mxu0 0.0
        %1066 = vmatmul.mubr.f32.gmra.mxu0 %v999
        %v1067 = vpop.f32.mrf.mxu0
        %v1068 = vadd.f32 0.0, %v1067
        %v1069 = vpop.f32.mrf.mxu0
        %1070 = vdwg.mxu0
        %1071 = vrot.lane.b32.xlu0 %v734, 120
        %v1072 = vpop.permute.xlu0 %1071
        %1073 = vrot.lane.b32.xlu0 %v734, 88
        %v1074 = vpop.permute.xlu0 %1073
        %v1075 = vsel %vm745, %v1072, 0
        %v1077 = vsel %vm745, %v1074, 0
        %1079 = vmatprep.subr.mxu0 0.0
        %1080 = vmatpush1.xpose.msra.mxu0 0.0
        %1081 = vmatprep.subr.mxu0 0.0
        %1082 = vmatpush1.xpose.msra.mxu0 0.0
        %1083 = vmatprep.subr.mxu0 0.0
        %1084 = vmatpush1.xpose.msra.mxu0 0.0
        %1085 = vmatprep.subr.mxu0 0.0
        %1086 = vmatpush1.xpose.msra.mxu0 0.0
        %1087 = vmatprep.subr.mxu0 0.0
        %1088 = vmatpush1.xpose.msra.mxu0 0.0
        %1089 = vmatprep.subr.mxu0 0.0
        %1090 = vmatpush1.xpose.msra.mxu0 0.0
        %1091 = vmatprep.subr.mxu0 0.0
        %1092 = vmatpush1.xpose.msra.mxu0 0.0
        %1093 = vmatprep.subr.mxu0 0.0
        %1094 = vmatpush1.xpose.msra.mxu0 0.0
        %1095 = vmatprep.subr.mxu0 0.0
        %1096 = vmatpush1.xpose.msra.mxu0 0.0
        %1097 = vmatprep.subr.mxu0 0.0
        %1098 = vmatpush1.xpose.msra.mxu0 0.0
        %1099 = vmatprep.subr.mxu0 0.0
        %1100 = vmatpush1.xpose.msra.mxu0 0.0
        %1101 = vmatprep.subr.mxu0 0.0
        %1102 = vmatpush1.xpose.msra.mxu0 0.0
        %1103 = vmatprep.subr.mxu0 0.0
        %1104 = vmatpush1.xpose.msra.mxu0 0.0
        %1105 = vmatprep.subr.mxu0 0.0
        %1106 = vmatpush1.xpose.msra.mxu0 0.0
        %1107 = vmatprep.subr.mxu0 0.0
        %1108 = vmatpush1.xpose.msra.mxu0 0.0
        %1109 = vmatprep.subr.mxu0 0.0
        %1110 = vmatpush1.xpose.msra.mxu0 %v1077
        %1111 = vmatprep.subr.mxu0 0.0
        %1112 = vmatpush2.xpose.msra.mxu0 0.0
        %1113 = vmatprep.subr.mxu0 0.0
        %1114 = vmatpush2.xpose.msra.mxu0 0.0
        %1115 = vmatprep.subr.mxu0 0.0
        %1116 = vmatpush2.xpose.msra.mxu0 0.0
        %1117 = vmatprep.subr.mxu0 0.0
        %1118 = vmatpush2.xpose.msra.mxu0 0.0
        %1119 = vmatprep.subr.mxu0 0.0
        %1120 = vmatpush2.xpose.msra.mxu0 0.0
        %1121 = vmatprep.subr.mxu0 0.0
        %1122 = vmatpush2.xpose.msra.mxu0 0.0
        %1123 = vmatprep.subr.mxu0 0.0
        %1124 = vmatpush2.xpose.msra.mxu0 0.0
        %1125 = vmatprep.subr.mxu0 0.0
        %1126 = vmatpush2.xpose.msra.mxu0 0.0
        %1127 = vmatprep.subr.mxu0 0.0
        %1128 = vmatpush2.xpose.msra.mxu0 0.0
        %1129 = vmatprep.subr.mxu0 0.0
        %1130 = vmatpush2.xpose.msra.mxu0 0.0
        %1131 = vmatprep.subr.mxu0 0.0
        %1132 = vmatpush2.xpose.msra.mxu0 0.0
        %1133 = vmatprep.subr.mxu0 0.0
        %1134 = vmatpush2.xpose.msra.mxu0 0.0
        %1135 = vmatprep.subr.mxu0 0.0
        %1136 = vmatpush2.xpose.msra.mxu0 0.0
        %1137 = vmatprep.subr.mxu0 0.0
        %1138 = vmatpush2.xpose.msra.mxu0 0.0
        %1139 = vmatprep.subr.mxu0 0.0
        %1140 = vmatpush2.xpose.msra.mxu0 0.0
        %1141 = vmatprep.subr.mxu0 0.0
        %1142 = vmatpush2.xpose.msra.mxu0 0.0
        %1143 = vmatprep.mubr.f32.mxu0 0.0
        %1144 = vmatmul.mubr.f32.gmra.mxu0 %v1075
        %v1145 = vpop.f32.mrf.mxu0
        %v1146 = vadd.f32 0.0, %v1145
        %v1147 = vpop.f32.mrf.mxu0
        %1148 = vdwg.mxu0
        %1149 = vrot.lane.b32.xlu0 %v739, 120
        %v1150 = vpop.permute.xlu0 %1149
        %1151 = vrot.lane.b32.xlu0 %v739, 88
        %v1152 = vpop.permute.xlu0 %1151
        %v1153 = vsel %vm745, %v1150, 0
        %v1155 = vsel %vm745, %v1152, 0
        %1157 = vmatprep.subr.mxu0 0.0
        %1158 = vmatpush1.xpose.msra.mxu0 0.0
        %1159 = vmatprep.subr.mxu0 0.0
        %1160 = vmatpush1.xpose.msra.mxu0 0.0
        %1161 = vmatprep.subr.mxu0 0.0
        %1162 = vmatpush1.xpose.msra.mxu0 0.0
        %1163 = vmatprep.subr.mxu0 0.0
        %1164 = vmatpush1.xpose.msra.mxu0 0.0
        %1165 = vmatprep.subr.mxu0 0.0
        %1166 = vmatpush1.xpose.msra.mxu0 0.0
        %1167 = vmatprep.subr.mxu0 0.0
        %1168 = vmatpush1.xpose.msra.mxu0 0.0
        %1169 = vmatprep.subr.mxu0 0.0
        %1170 = vmatpush1.xpose.msra.mxu0 0.0
        %1171 = vmatprep.subr.mxu0 0.0
        %1172 = vmatpush1.xpose.msra.mxu0 0.0
        %1173 = vmatprep.subr.mxu0 0.0
        %1174 = vmatpush1.xpose.msra.mxu0 0.0
        %1175 = vmatprep.subr.mxu0 0.0
        %1176 = vmatpush1.xpose.msra.mxu0 0.0
        %1177 = vmatprep.subr.mxu0 0.0
        %1178 = vmatpush1.xpose.msra.mxu0 0.0
        %1179 = vmatprep.subr.mxu0 0.0
        %1180 = vmatpush1.xpose.msra.mxu0 0.0
        %1181 = vmatprep.subr.mxu0 0.0
        %1182 = vmatpush1.xpose.msra.mxu0 0.0
        %1183 = vmatprep.subr.mxu0 0.0
        %1184 = vmatpush1.xpose.msra.mxu0 0.0
        %1185 = vmatprep.subr.mxu0 0.0
        %1186 = vmatpush1.xpose.msra.mxu0 0.0
        %1187 = vmatprep.subr.mxu0 0.0
        %1188 = vmatpush1.xpose.msra.mxu0 %v1155
        %1189 = vmatprep.subr.mxu0 0.0
        %1190 = vmatpush2.xpose.msra.mxu0 0.0
        %1191 = vmatprep.subr.mxu0 0.0
        %1192 = vmatpush2.xpose.msra.mxu0 0.0
        %1193 = vmatprep.subr.mxu0 0.0
        %1194 = vmatpush2.xpose.msra.mxu0 0.0
        %1195 = vmatprep.subr.mxu0 0.0
        %1196 = vmatpush2.xpose.msra.mxu0 0.0
        %1197 = vmatprep.subr.mxu0 0.0
        %1198 = vmatpush2.xpose.msra.mxu0 0.0
        %1199 = vmatprep.subr.mxu0 0.0
        %1200 = vmatpush2.xpose.msra.mxu0 0.0
        %1201 = vmatprep.subr.mxu0 0.0
        %1202 = vmatpush2.xpose.msra.mxu0 0.0
        %1203 = vmatprep.subr.mxu0 0.0
        %1204 = vmatpush2.xpose.msra.mxu0 0.0
        %1205 = vmatprep.subr.mxu0 0.0
        %1206 = vmatpush2.xpose.msra.mxu0 0.0
        %1207 = vmatprep.subr.mxu0 0.0
        %1208 = vmatpush2.xpose.msra.mxu0 0.0
        %1209 = vmatprep.subr.mxu0 0.0
        %1210 = vmatpush2.xpose.msra.mxu0 0.0
        %1211 = vmatprep.subr.mxu0 0.0
        %1212 = vmatpush2.xpose.msra.mxu0 0.0
        %1213 = vmatprep.subr.mxu0 0.0
        %1214 = vmatpush2.xpose.msra.mxu0 0.0
        %1215 = vmatprep.subr.mxu0 0.0
        %1216 = vmatpush2.xpose.msra.mxu0 0.0
        %1217 = vmatprep.subr.mxu0 0.0
        %1218 = vmatpush2.xpose.msra.mxu0 0.0
        %1219 = vmatprep.subr.mxu0 0.0
        %1220 = vmatpush2.xpose.msra.mxu0 0.0
        %1221 = vmatprep.mubr.f32.mxu0 0.0
        %1222 = vmatmul.mubr.f32.gmra.mxu0 %v1153
        %v1223 = vpop.f32.mrf.mxu0
        %v1224 = vadd.f32 0.0, %v1223
        %v1225 = vpop.f32.mrf.mxu0
        %1226 = vdwg.mxu0
        %v1227 = vsel %vm745, %v1146, -inf
        %1228 = vmax.xlane.f32.xlu0 %v1227
        %v1229 = vpop.xlane.xlu0 %1228
        %v1230 = vsel %vm745, %v1224, -inf
        %1231 = vmax.xlane.f32.xlu0 %v1230
        %v1232 = vpop.xlane.xlu0 %1231
        %v1233 = vsub.f32 %v1146, %v1229
        %v1234 = vsub.f32 %v1224, %v1232
        %v1235 = vmul.f32 %v1233, 1.442695
        %v1236 = vpow.pop %v1235
        %v1237 = vmul.f32 %v1234, 1.442695
        %v1238 = vpow.pop %v1237
        %v1239 = vsel %vm745, %v1236, 0.0
        %1240 = vadd.xlane.f32.xlu0 %v1239
        %v1241 = vpop.xlane.xlu0 %1240
        %v1242 = vsel %vm745, %v1238, 0.0
        %1243 = vadd.xlane.f32.xlu0 %v1242
        %v1244 = vpop.xlane.xlu0 %1243
        %v1245 = vrcp.pop %v1241
        %v1246 = vrcp.pop %v1244
        %v1247 = vmul.f32 %v1236, %v1245
        %v1248 = vmul.f32 %v1238, %v1246
        %1249 = vrot.lane.b32.xlu0 %v734, 56
        %v1250 = vpop.permute.xlu0 %1249
        %v1253 = vsel %vm745, %v1247, 0
        %1255 = vmatprep.subr.mxu0 0.0
        %1256 = vmatpush1.msra.mxu0 0.0
        %1257 = vmatprep.subr.mxu0 0.0
        %1258 = vmatpush1.msra.mxu0 0.0
        %1259 = vmatprep.subr.mxu0 0.0
        %1260 = vmatpush1.msra.mxu0 0.0
        %1261 = vmatprep.subr.mxu0 0.0
        %1262 = vmatpush1.msra.mxu0 0.0
        %1263 = vmatprep.subr.mxu0 0.0
        %1264 = vmatpush1.msra.mxu0 0.0
        %1265 = vmatprep.subr.mxu0 0.0
        %1266 = vmatpush1.msra.mxu0 0.0
        %1267 = vmatprep.subr.mxu0 0.0
        %1268 = vmatpush1.msra.mxu0 0.0
        %1269 = vmatprep.subr.mxu0 0.0
        %1270 = vmatpush1.msra.mxu0 0.0
        %1271 = vmatprep.subr.mxu0 0.0
        %1272 = vmatpush1.msra.mxu0 0.0
        %1273 = vmatprep.subr.mxu0 0.0
        %1274 = vmatpush1.msra.mxu0 0.0
        %1275 = vmatprep.subr.mxu0 0.0
        %1276 = vmatpush1.msra.mxu0 0.0
        %1277 = vmatprep.subr.mxu0 0.0
        %1278 = vmatpush1.msra.mxu0 0.0
        %1279 = vmatprep.subr.mxu0 0.0
        %1280 = vmatpush1.msra.mxu0 0.0
        %1281 = vmatprep.subr.mxu0 0.0
        %1282 = vmatpush1.msra.mxu0 0.0
        %1283 = vmatprep.subr.mxu0 0.0
        %1284 = vmatpush1.msra.mxu0 0.0
        %1285 = vmatprep.subr.mxu0 0.0
        %1286 = vmatpush1.msra.mxu0 %v1250
        %1287 = vmatprep.subr.mxu0 0.0
        %1288 = vmatpush2.msra.mxu0 0.0
        %1289 = vmatprep.subr.mxu0 0.0
        %1290 = vmatpush2.msra.mxu0 0.0
        %1291 = vmatprep.subr.mxu0 0.0
        %1292 = vmatpush2.msra.mxu0 0.0
        %1293 = vmatprep.subr.mxu0 0.0
        %1294 = vmatpush2.msra.mxu0 0.0
        %1295 = vmatprep.subr.mxu0 0.0
        %1296 = vmatpush2.msra.mxu0 0.0
        %1297 = vmatprep.subr.mxu0 0.0
        %1298 = vmatpush2.msra.mxu0 0.0
        %1299 = vmatprep.subr.mxu0 0.0
        %1300 = vmatpush2.msra.mxu0 0.0
        %1301 = vmatprep.subr.mxu0 0.0
        %1302 = vmatpush2.msra.mxu0 0.0
        %1303 = vmatprep.subr.mxu0 0.0
        %1304 = vmatpush2.msra.mxu0 0.0
        %1305 = vmatprep.subr.mxu0 0.0
        %1306 = vmatpush2.msra.mxu0 0.0
        %1307 = vmatprep.subr.mxu0 0.0
        %1308 = vmatpush2.msra.mxu0 0.0
        %1309 = vmatprep.subr.mxu0 0.0
        %1310 = vmatpush2.msra.mxu0 0.0
        %1311 = vmatprep.subr.mxu0 0.0
        %1312 = vmatpush2.msra.mxu0 0.0
        %1313 = vmatprep.subr.mxu0 0.0
        %1314 = vmatpush2.msra.mxu0 0.0
        %1315 = vmatprep.subr.mxu0 0.0
        %1316 = vmatpush2.msra.mxu0 0.0
        %1317 = vmatprep.subr.mxu0 0.0
        %1318 = vmatpush2.msra.mxu0 0.0
        %1319 = vmatprep.mubr.f32.mxu0 0.0
        %1320 = vmatmul.mubr.f32.gmra.mxu0 %v1253
        %v1321 = vpop.f32.mrf.mxu0
        %v1322 = vadd.f32 0.0, %v1321
        %v1323 = vpop.f32.mrf.mxu0
        %1324 = vdwg.mxu0
        %1325 = vrot.lane.b32.xlu0 %v739, 56
        %v1326 = vpop.permute.xlu0 %1325
        %v1329 = vsel %vm745, %v1248, 0
        %1331 = vmatprep.subr.mxu0 0.0
        %1332 = vmatpush1.msra.mxu0 0.0
        %1333 = vmatprep.subr.mxu0 0.0
        %1334 = vmatpush1.msra.mxu0 0.0
        %1335 = vmatprep.subr.mxu0 0.0
        %1336 = vmatpush1.msra.mxu0 0.0
        %1337 = vmatprep.subr.mxu0 0.0
        %1338 = vmatpush1.msra.mxu0 0.0
        %1339 = vmatprep.subr.mxu0 0.0
        %1340 = vmatpush1.msra.mxu0 0.0
        %1341 = vmatprep.subr.mxu0 0.0
        %1342 = vmatpush1.msra.mxu0 0.0
        %1343 = vmatprep.subr.mxu0 0.0
        %1344 = vmatpush1.msra.mxu0 0.0
        %1345 = vmatprep.subr.mxu0 0.0
        %1346 = vmatpush1.msra.mxu0 0.0
        %1347 = vmatprep.subr.mxu0 0.0
        %1348 = vmatpush1.msra.mxu0 0.0
        %1349 = vmatprep.subr.mxu0 0.0
        %1350 = vmatpush1.msra.mxu0 0.0
        %1351 = vmatprep.subr.mxu0 0.0
        %1352 = vmatpush1.msra.mxu0 0.0
        %1353 = vmatprep.subr.mxu0 0.0
        %1354 = vmatpush1.msra.mxu0 0.0
        %1355 = vmatprep.subr.mxu0 0.0
        %1356 = vmatpush1.msra.mxu0 0.0
        %1357 = vmatprep.subr.mxu0 0.0
        %1358 = vmatpush1.msra.mxu0 0.0
        %1359 = vmatprep.subr.mxu0 0.0
        %1360 = vmatpush1.msra.mxu0 0.0
        %1361 = vmatprep.subr.mxu0 0.0
        %1362 = vmatpush1.msra.mxu0 %v1326
        %1363 = vmatprep.subr.mxu0 0.0
        %1364 = vmatpush2.msra.mxu0 0.0
        %1365 = vmatprep.subr.mxu0 0.0
        %1366 = vmatpush2.msra.mxu0 0.0
        %1367 = vmatprep.subr.mxu0 0.0
        %1368 = vmatpush2.msra.mxu0 0.0
        %1369 = vmatprep.subr.mxu0 0.0
        %1370 = vmatpush2.msra.mxu0 0.0
        %1371 = vmatprep.subr.mxu0 0.0
        %1372 = vmatpush2.msra.mxu0 0.0
        %1373 = vmatprep.subr.mxu0 0.0
        %1374 = vmatpush2.msra.mxu0 0.0
        %1375 = vmatprep.subr.mxu0 0.0
        %1376 = vmatpush2.msra.mxu0 0.0
        %1377 = vmatprep.subr.mxu0 0.0
        %1378 = vmatpush2.msra.mxu0 0.0
        %1379 = vmatprep.subr.mxu0 0.0
        %1380 = vmatpush2.msra.mxu0 0.0
        %1381 = vmatprep.subr.mxu0 0.0
        %1382 = vmatpush2.msra.mxu0 0.0
        %1383 = vmatprep.subr.mxu0 0.0
        %1384 = vmatpush2.msra.mxu0 0.0
        %1385 = vmatprep.subr.mxu0 0.0
        %1386 = vmatpush2.msra.mxu0 0.0
        %1387 = vmatprep.subr.mxu0 0.0
        %1388 = vmatpush2.msra.mxu0 0.0
        %1389 = vmatprep.subr.mxu0 0.0
        %1390 = vmatpush2.msra.mxu0 0.0
        %1391 = vmatprep.subr.mxu0 0.0
        %1392 = vmatpush2.msra.mxu0 0.0
        %1393 = vmatprep.subr.mxu0 0.0
        %1394 = vmatpush2.msra.mxu0 0.0
        %1395 = vmatprep.mubr.f32.mxu0 0.0
        %1396 = vmatmul.mubr.f32.gmra.mxu0 %v1329
        %v1397 = vpop.f32.mrf.mxu0
        %v1398 = vadd.f32 0.0, %v1397
        %v1399 = vpop.f32.mrf.mxu0
        %1400 = vdwg.mxu0
        %1401 = vrot.lane.b32.xlu0 %v734, 112
        %v1402 = vpop.permute.xlu0 %1401
        %1403 = vrot.lane.b32.xlu0 %v734, 80
        %v1404 = vpop.permute.xlu0 %1403
        %v1405 = vsel %vm745, %v1402, 0
        %v1407 = vsel %vm745, %v1404, 0
        %1409 = vmatprep.subr.mxu0 0.0
        %1410 = vmatpush1.xpose.msra.mxu0 0.0
        %1411 = vmatprep.subr.mxu0 0.0
        %1412 = vmatpush1.xpose.msra.mxu0 0.0
        %1413 = vmatprep.subr.mxu0 0.0
        %1414 = vmatpush1.xpose.msra.mxu0 0.0
        %1415 = vmatprep.subr.mxu0 0.0
        %1416 = vmatpush1.xpose.msra.mxu0 0.0
        %1417 = vmatprep.subr.mxu0 0.0
        %1418 = vmatpush1.xpose.msra.mxu0 0.0
        %1419 = vmatprep.subr.mxu0 0.0
        %1420 = vmatpush1.xpose.msra.mxu0 0.0
        %1421 = vmatprep.subr.mxu0 0.0
        %1422 = vmatpush1.xpose.msra.mxu0 0.0
        %1423 = vmatprep.subr.mxu0 0.0
        %1424 = vmatpush1.xpose.msra.mxu0 0.0
        %1425 = vmatprep.subr.mxu0 0.0
        %1426 = vmatpush1.xpose.msra.mxu0 0.0
        %1427 = vmatprep.subr.mxu0 0.0
        %1428 = vmatpush1.xpose.msra.mxu0 0.0
        %1429 = vmatprep.subr.mxu0 0.0
        %1430 = vmatpush1.xpose.msra.mxu0 0.0
        %1431 = vmatprep.subr.mxu0 0.0
        %1432 = vmatpush1.xpose.msra.mxu0 0.0
        %1433 = vmatprep.subr.mxu0 0.0
        %1434 = vmatpush1.xpose.msra.mxu0 0.0
        %1435 = vmatprep.subr.mxu0 0.0
        %1436 = vmatpush1.xpose.msra.mxu0 0.0
        %1437 = vmatprep.subr.mxu0 0.0
        %1438 = vmatpush1.xpose.msra.mxu0 0.0
        %1439 = vmatprep.subr.mxu0 0.0
        %1440 = vmatpush1.xpose.msra.mxu0 %v1407
        %1441 = vmatprep.subr.mxu0 0.0
        %1442 = vmatpush2.xpose.msra.mxu0 0.0
        %1443 = vmatprep.subr.mxu0 0.0
        %1444 = vmatpush2.xpose.msra.mxu0 0.0
        %1445 = vmatprep.subr.mxu0 0.0
        %1446 = vmatpush2.xpose.msra.mxu0 0.0
        %1447 = vmatprep.subr.mxu0 0.0
        %1448 = vmatpush2.xpose.msra.mxu0 0.0
        %1449 = vmatprep.subr.mxu0 0.0
        %1450 = vmatpush2.xpose.msra.mxu0 0.0
        %1451 = vmatprep.subr.mxu0 0.0
        %1452 = vmatpush2.xpose.msra.mxu0 0.0
        %1453 = vmatprep.subr.mxu0 0.0
        %1454 = vmatpush2.xpose.msra.mxu0 0.0
        %1455 = vmatprep.subr.mxu0 0.0
        %1456 = vmatpush2.xpose.msra.mxu0 0.0
        %1457 = vmatprep.subr.mxu0 0.0
        %1458 = vmatpush2.xpose.msra.mxu0 0.0
        %1459 = vmatprep.subr.mxu0 0.0
        %1460 = vmatpush2.xpose.msra.mxu0 0.0
        %1461 = vmatprep.subr.mxu0 0.0
        %1462 = vmatpush2.xpose.msra.mxu0 0.0
        %1463 = vmatprep.subr.mxu0 0.0
        %1464 = vmatpush2.xpose.msra.mxu0 0.0
        %1465 = vmatprep.subr.mxu0 0.0
        %1466 = vmatpush2.xpose.msra.mxu0 0.0
        %1467 = vmatprep.subr.mxu0 0.0
        %1468 = vmatpush2.xpose.msra.mxu0 0.0
        %1469 = vmatprep.subr.mxu0 0.0
        %1470 = vmatpush2.xpose.msra.mxu0 0.0
        %1471 = vmatprep.subr.mxu0 0.0
        %1472 = vmatpush2.xpose.msra.mxu0 0.0
        %1473 = vmatprep.mubr.f32.mxu0 0.0
        %1474 = vmatmul.mubr.f32.gmra.mxu0 %v1405
        %v1475 = vpop.f32.mrf.mxu0
        %v1476 = vadd.f32 0.0, %v1475
        %v1477 = vpop.f32.mrf.mxu0
        %1478 = vdwg.mxu0
        %1479 = vrot.lane.b32.xlu0 %v739, 112
        %v1480 = vpop.permute.xlu0 %1479
        %1481 = vrot.lane.b32.xlu0 %v739, 80
        %v1482 = vpop.permute.xlu0 %1481
        %v1483 = vsel %vm745, %v1480, 0
        %v1485 = vsel %vm745, %v1482, 0
        %1487 = vmatprep.subr.mxu0 0.0
        %1488 = vmatpush1.xpose.msra.mxu0 0.0
        %1489 = vmatprep.subr.mxu0 0.0
        %1490 = vmatpush1.xpose.msra.mxu0 0.0
        %1491 = vmatprep.subr.mxu0 0.0
        %1492 = vmatpush1.xpose.msra.mxu0 0.0
        %1493 = vmatprep.subr.mxu0 0.0
        %1494 = vmatpush1.xpose.msra.mxu0 0.0
        %1495 = vmatprep.subr.mxu0 0.0
        %1496 = vmatpush1.xpose.msra.mxu0 0.0
        %1497 = vmatprep.subr.mxu0 0.0
        %1498 = vmatpush1.xpose.msra.mxu0 0.0
        %1499 = vmatprep.subr.mxu0 0.0
        %1500 = vmatpush1.xpose.msra.mxu0 0.0
        %1501 = vmatprep.subr.mxu0 0.0
        %1502 = vmatpush1.xpose.msra.mxu0 0.0
        %1503 = vmatprep.subr.mxu0 0.0
        %1504 = vmatpush1.xpose.msra.mxu0 0.0
        %1505 = vmatprep.subr.mxu0 0.0
        %1506 = vmatpush1.xpose.msra.mxu0 0.0
        %1507 = vmatprep.subr.mxu0 0.0
        %1508 = vmatpush1.xpose.msra.mxu0 0.0
        %1509 = vmatprep.subr.mxu0 0.0
        %1510 = vmatpush1.xpose.msra.mxu0 0.0
        %1511 = vmatprep.subr.mxu0 0.0
        %1512 = vmatpush1.xpose.msra.mxu0 0.0
        %1513 = vmatprep.subr.mxu0 0.0
        %1514 = vmatpush1.xpose.msra.mxu0 0.0
        %1515 = vmatprep.subr.mxu0 0.0
        %1516 = vmatpush1.xpose.msra.mxu0 0.0
        %1517 = vmatprep.subr.mxu0 0.0
        %1518 = vmatpush1.xpose.msra.mxu0 %v1485
        %1519 = vmatprep.subr.mxu0 0.0
        %1520 = vmatpush2.xpose.msra.mxu0 0.0
        %1521 = vmatprep.subr.mxu0 0.0
        %1522 = vmatpush2.xpose.msra.mxu0 0.0
        %1523 = vmatprep.subr.mxu0 0.0
        %1524 = vmatpush2.xpose.msra.mxu0 0.0
        %1525 = vmatprep.subr.mxu0 0.0
        %1526 = vmatpush2.xpose.msra.mxu0 0.0
        %1527 = vmatprep.subr.mxu0 0.0
        %1528 = vmatpush2.xpose.msra.mxu0 0.0
        %1529 = vmatprep.subr.mxu0 0.0
        %1530 = vmatpush2.xpose.msra.mxu0 0.0
        %1531 = vmatprep.subr.mxu0 0.0
        %1532 = vmatpush2.xpose.msra.mxu0 0.0
        %1533 = vmatprep.subr.mxu0 0.0
        %1534 = vmatpush2.xpose.msra.mxu0 0.0
        %1535 = vmatprep.subr.mxu0 0.0
        %1536 = vmatpush2.xpose.msra.mxu0 0.0
        %1537 = vmatprep.subr.mxu0 0.0
        %1538 = vmatpush2.xpose.msra.mxu0 0.0
        %1539 = vmatprep.subr.mxu0 0.0
        %1540 = vmatpush2.xpose.msra.mxu0 0.0
        %1541 = vmatprep.subr.mxu0 0.0
        %1542 = vmatpush2.xpose.msra.mxu0 0.0
        %1543 = vmatprep.subr.mxu0 0.0
        %1544 = vmatpush2.xpose.msra.mxu0 0.0
        %1545 = vmatprep.subr.mxu0 0.0
        %1546 = vmatpush2.xpose.msra.mxu0 0.0
        %1547 = vmatprep.subr.mxu0 0.0
        %1548 = vmatpush2.xpose.msra.mxu0 0.0
        %1549 = vmatprep.subr.mxu0 0.0
        %1550 = vmatpush2.xpose.msra.mxu0 0.0
        %1551 = vmatprep.mubr.f32.mxu0 0.0
        %1552 = vmatmul.mubr.f32.gmra.mxu0 %v1483
        %v1553 = vpop.f32.mrf.mxu0
        %v1554 = vadd.f32 0.0, %v1553
        %v1555 = vpop.f32.mrf.mxu0
        %1556 = vdwg.mxu0
        %v1557 = vsel %vm745, %v1476, -inf
        %1558 = vmax.xlane.f32.xlu0 %v1557
        %v1559 = vpop.xlane.xlu0 %1558
        %v1560 = vsel %vm745, %v1554, -inf
        %1561 = vmax.xlane.f32.xlu0 %v1560
        %v1562 = vpop.xlane.xlu0 %1561
        %v1563 = vsub.f32 %v1476, %v1559
        %v1564 = vsub.f32 %v1554, %v1562
        %v1565 = vmul.f32 %v1563, 1.442695
        %v1566 = vpow.pop %v1565
        %v1567 = vmul.f32 %v1564, 1.442695
        %v1568 = vpow.pop %v1567
        %v1569 = vsel %vm745, %v1566, 0.0
        %1570 = vadd.xlane.f32.xlu0 %v1569
        %v1571 = vpop.xlane.xlu0 %1570
        %v1572 = vsel %vm745, %v1568, 0.0
        %1573 = vadd.xlane.f32.xlu0 %v1572
        %v1574 = vpop.xlane.xlu0 %1573
        %v1575 = vrcp.pop %v1571
        %v1576 = vrcp.pop %v1574
        %v1577 = vmul.f32 %v1566, %v1575
        %v1578 = vmul.f32 %v1568, %v1576
        %1579 = vrot.lane.b32.xlu0 %v734, 48
        %v1580 = vpop.permute.xlu0 %1579
        %v1583 = vsel %vm745, %v1577, 0
        %1585 = vmatprep.subr.mxu0 0.0
        %1586 = vmatpush1.msra.mxu0 0.0
        %1587 = vmatprep.subr.mxu0 0.0
        %1588 = vmatpush1.msra.mxu0 0.0
        %1589 = vmatprep.subr.mxu0 0.0
        %1590 = vmatpush1.msra.mxu0 0.0
        %1591 = vmatprep.subr.mxu0 0.0
        %1592 = vmatpush1.msra.mxu0 0.0
        %1593 = vmatprep.subr.mxu0 0.0
        %1594 = vmatpush1.msra.mxu0 0.0
        %1595 = vmatprep.subr.mxu0 0.0
        %1596 = vmatpush1.msra.mxu0 0.0
        %1597 = vmatprep.subr.mxu0 0.0
        %1598 = vmatpush1.msra.mxu0 0.0
        %1599 = vmatprep.subr.mxu0 0.0
        %1600 = vmatpush1.msra.mxu0 0.0
        %1601 = vmatprep.subr.mxu0 0.0
        %1602 = vmatpush1.msra.mxu0 0.0
        %1603 = vmatprep.subr.mxu0 0.0
        %1604 = vmatpush1.msra.mxu0 0.0
        %1605 = vmatprep.subr.mxu0 0.0
        %1606 = vmatpush1.msra.mxu0 0.0
        %1607 = vmatprep.subr.mxu0 0.0
        %1608 = vmatpush1.msra.mxu0 0.0
        %1609 = vmatprep.subr.mxu0 0.0
        %1610 = vmatpush1.msra.mxu0 0.0
        %1611 = vmatprep.subr.mxu0 0.0
        %1612 = vmatpush1.msra.mxu0 0.0
        %1613 = vmatprep.subr.mxu0 0.0
        %1614 = vmatpush1.msra.mxu0 0.0
        %1615 = vmatprep.subr.mxu0 0.0
        %1616 = vmatpush1.msra.mxu0 %v1580
        %1617 = vmatprep.subr.mxu0 0.0
        %1618 = vmatpush2.msra.mxu0 0.0
        %1619 = vmatprep.subr.mxu0 0.0
        %1620 = vmatpush2.msra.mxu0 0.0
        %1621 = vmatprep.subr.mxu0 0.0
        %1622 = vmatpush2.msra.mxu0 0.0
        %1623 = vmatprep.subr.mxu0 0.0
        %1624 = vmatpush2.msra.mxu0 0.0
        %1625 = vmatprep.subr.mxu0 0.0
        %1626 = vmatpush2.msra.mxu0 0.0
        %1627 = vmatprep.subr.mxu0 0.0
        %1628 = vmatpush2.msra.mxu0 0.0
        %1629 = vmatprep.subr.mxu0 0.0
        %1630 = vmatpush2.msra.mxu0 0.0
        %1631 = vmatprep.subr.mxu0 0.0
        %1632 = vmatpush2.msra.mxu0 0.0
        %1633 = vmatprep.subr.mxu0 0.0
        %1634 = vmatpush2.msra.mxu0 0.0
        %1635 = vmatprep.subr.mxu0 0.0
        %1636 = vmatpush2.msra.mxu0 0.0
        %1637 = vmatprep.subr.mxu0 0.0
        %1638 = vmatpush2.msra.mxu0 0.0
        %1639 = vmatprep.subr.mxu0 0.0
        %1640 = vmatpush2.msra.mxu0 0.0
        %1641 = vmatprep.subr.mxu0 0.0
        %1642 = vmatpush2.msra.mxu0 0.0
        %1643 = vmatprep.subr.mxu0 0.0
        %1644 = vmatpush2.msra.mxu0 0.0
        %1645 = vmatprep.subr.mxu0 0.0
        %1646 = vmatpush2.msra.mxu0 0.0
        %1647 = vmatprep.subr.mxu0 0.0
        %1648 = vmatpush2.msra.mxu0 0.0
        %1649 = vmatprep.mubr.f32.mxu0 0.0
        %1650 = vmatmul.mubr.f32.gmra.mxu0 %v1583
        %v1651 = vpop.f32.mrf.mxu0
        %v1652 = vadd.f32 0.0, %v1651
        %v1653 = vpop.f32.mrf.mxu0
        %1654 = vdwg.mxu0
        %1655 = vrot.lane.b32.xlu0 %v739, 48
        %v1656 = vpop.permute.xlu0 %1655
        %v1659 = vsel %vm745, %v1578, 0
        %1661 = vmatprep.subr.mxu0 0.0
        %1662 = vmatpush1.msra.mxu0 0.0
        %1663 = vmatprep.subr.mxu0 0.0
        %1664 = vmatpush1.msra.mxu0 0.0
        %1665 = vmatprep.subr.mxu0 0.0
        %1666 = vmatpush1.msra.mxu0 0.0
        %1667 = vmatprep.subr.mxu0 0.0
        %1668 = vmatpush1.msra.mxu0 0.0
        %1669 = vmatprep.subr.mxu0 0.0
        %1670 = vmatpush1.msra.mxu0 0.0
        %1671 = vmatprep.subr.mxu0 0.0
        %1672 = vmatpush1.msra.mxu0 0.0
        %1673 = vmatprep.subr.mxu0 0.0
        %1674 = vmatpush1.msra.mxu0 0.0
        %1675 = vmatprep.subr.mxu0 0.0
        %1676 = vmatpush1.msra.mxu0 0.0
        %1677 = vmatprep.subr.mxu0 0.0
        %1678 = vmatpush1.msra.mxu0 0.0
        %1679 = vmatprep.subr.mxu0 0.0
        %1680 = vmatpush1.msra.mxu0 0.0
        %1681 = vmatprep.subr.mxu0 0.0
        %1682 = vmatpush1.msra.mxu0 0.0
        %1683 = vmatprep.subr.mxu0 0.0
        %1684 = vmatpush1.msra.mxu0 0.0
        %1685 = vmatprep.subr.mxu0 0.0
        %1686 = vmatpush1.msra.mxu0 0.0
        %1687 = vmatprep.subr.mxu0 0.0
        %1688 = vmatpush1.msra.mxu0 0.0
        %1689 = vmatprep.subr.mxu0 0.0
        %1690 = vmatpush1.msra.mxu0 0.0
        %1691 = vmatprep.subr.mxu0 0.0
        %1692 = vmatpush1.msra.mxu0 %v1656
        %1693 = vmatprep.subr.mxu0 0.0
        %1694 = vmatpush2.msra.mxu0 0.0
        %1695 = vmatprep.subr.mxu0 0.0
        %1696 = vmatpush2.msra.mxu0 0.0
        %1697 = vmatprep.subr.mxu0 0.0
        %1698 = vmatpush2.msra.mxu0 0.0
        %1699 = vmatprep.subr.mxu0 0.0
        %1700 = vmatpush2.msra.mxu0 0.0
        %1701 = vmatprep.subr.mxu0 0.0
        %1702 = vmatpush2.msra.mxu0 0.0
        %1703 = vmatprep.subr.mxu0 0.0
        %1704 = vmatpush2.msra.mxu0 0.0
        %1705 = vmatprep.subr.mxu0 0.0
        %1706 = vmatpush2.msra.mxu0 0.0
        %1707 = vmatprep.subr.mxu0 0.0
        %1708 = vmatpush2.msra.mxu0 0.0
        %1709 = vmatprep.subr.mxu0 0.0
        %1710 = vmatpush2.msra.mxu0 0.0
        %1711 = vmatprep.subr.mxu0 0.0
        %1712 = vmatpush2.msra.mxu0 0.0
        %1713 = vmatprep.subr.mxu0 0.0
        %1714 = vmatpush2.msra.mxu0 0.0
        %1715 = vmatprep.subr.mxu0 0.0
        %1716 = vmatpush2.msra.mxu0 0.0
        %1717 = vmatprep.subr.mxu0 0.0
        %1718 = vmatpush2.msra.mxu0 0.0
        %1719 = vmatprep.subr.mxu0 0.0
        %1720 = vmatpush2.msra.mxu0 0.0
        %1721 = vmatprep.subr.mxu0 0.0
        %1722 = vmatpush2.msra.mxu0 0.0
        %1723 = vmatprep.subr.mxu0 0.0
        %1724 = vmatpush2.msra.mxu0 0.0
        %1725 = vmatprep.mubr.f32.mxu0 0.0
        %1726 = vmatmul.mubr.f32.gmra.mxu0 %v1659
        %v1727 = vpop.f32.mrf.mxu0
        %v1728 = vadd.f32 0.0, %v1727
        %v1729 = vpop.f32.mrf.mxu0
        %1730 = vdwg.mxu0
        %1731 = vrot.lane.b32.xlu0 %v734, 104
        %v1732 = vpop.permute.xlu0 %1731
        %1733 = vrot.lane.b32.xlu0 %v734, 72
        %v1734 = vpop.permute.xlu0 %1733
        %v1735 = vsel %vm745, %v1732, 0
        %v1737 = vsel %vm745, %v1734, 0
        %1739 = vmatprep.subr.mxu0 0.0
        %1740 = vmatpush1.xpose.msra.mxu0 0.0
        %1741 = vmatprep.subr.mxu0 0.0
        %1742 = vmatpush1.xpose.msra.mxu0 0.0
        %1743 = vmatprep.subr.mxu0 0.0
        %1744 = vmatpush1.xpose.msra.mxu0 0.0
        %1745 = vmatprep.subr.mxu0 0.0
        %1746 = vmatpush1.xpose.msra.mxu0 0.0
        %1747 = vmatprep.subr.mxu0 0.0
        %1748 = vmatpush1.xpose.msra.mxu0 0.0
        %1749 = vmatprep.subr.mxu0 0.0
        %1750 = vmatpush1.xpose.msra.mxu0 0.0
        %1751 = vmatprep.subr.mxu0 0.0
        %1752 = vmatpush1.xpose.msra.mxu0 0.0
        %1753 = vmatprep.subr.mxu0 0.0
        %1754 = vmatpush1.xpose.msra.mxu0 0.0
        %1755 = vmatprep.subr.mxu0 0.0
        %1756 = vmatpush1.xpose.msra.mxu0 0.0
        %1757 = vmatprep.subr.mxu0 0.0
        %1758 = vmatpush1.xpose.msra.mxu0 0.0
        %1759 = vmatprep.subr.mxu0 0.0
        %1760 = vmatpush1.xpose.msra.mxu0 0.0
        %1761 = vmatprep.subr.mxu0 0.0
        %1762 = vmatpush1.xpose.msra.mxu0 0.0
        %1763 = vmatprep.subr.mxu0 0.0
        %1764 = vmatpush1.xpose.msra.mxu0 0.0
        %1765 = vmatprep.subr.mxu0 0.0
        %1766 = vmatpush1.xpose.msra.mxu0 0.0
        %1767 = vmatprep.subr.mxu0 0.0
        %1768 = vmatpush1.xpose.msra.mxu0 0.0
        %1769 = vmatprep.subr.mxu0 0.0
        %1770 = vmatpush1.xpose.msra.mxu0 %v1737
        %1771 = vmatprep.subr.mxu0 0.0
        %1772 = vmatpush2.xpose.msra.mxu0 0.0
        %1773 = vmatprep.subr.mxu0 0.0
        %1774 = vmatpush2.xpose.msra.mxu0 0.0
        %1775 = vmatprep.subr.mxu0 0.0
        %1776 = vmatpush2.xpose.msra.mxu0 0.0
        %1777 = vmatprep.subr.mxu0 0.0
        %1778 = vmatpush2.xpose.msra.mxu0 0.0
        %1779 = vmatprep.subr.mxu0 0.0
        %1780 = vmatpush2.xpose.msra.mxu0 0.0
        %1781 = vmatprep.subr.mxu0 0.0
        %1782 = vmatpush2.xpose.msra.mxu0 0.0
        %1783 = vmatprep.subr.mxu0 0.0
        %1784 = vmatpush2.xpose.msra.mxu0 0.0
        %1785 = vmatprep.subr.mxu0 0.0
        %1786 = vmatpush2.xpose.msra.mxu0 0.0
        %1787 = vmatprep.subr.mxu0 0.0
        %1788 = vmatpush2.xpose.msra.mxu0 0.0
        %1789 = vmatprep.subr.mxu0 0.0
        %1790 = vmatpush2.xpose.msra.mxu0 0.0
        %1791 = vmatprep.subr.mxu0 0.0
        %1792 = vmatpush2.xpose.msra.mxu0 0.0
        %1793 = vmatprep.subr.mxu0 0.0
        %1794 = vmatpush2.xpose.msra.mxu0 0.0
        %1795 = vmatprep.subr.mxu0 0.0
        %1796 = vmatpush2.xpose.msra.mxu0 0.0
        %1797 = vmatprep.subr.mxu0 0.0
        %1798 = vmatpush2.xpose.msra.mxu0 0.0
        %1799 = vmatprep.subr.mxu0 0.0
        %1800 = vmatpush2.xpose.msra.mxu0 0.0
        %1801 = vmatprep.subr.mxu0 0.0
        %1802 = vmatpush2.xpose.msra.mxu0 0.0
        %1803 = vmatprep.mubr.f32.mxu0 0.0
        %1804 = vmatmul.mubr.f32.gmra.mxu0 %v1735
        %v1805 = vpop.f32.mrf.mxu0
        %v1806 = vadd.f32 0.0, %v1805
        %v1807 = vpop.f32.mrf.mxu0
        %1808 = vdwg.mxu0
        %1809 = vrot.lane.b32.xlu0 %v739, 104
        %v1810 = vpop.permute.xlu0 %1809
        %1811 = vrot.lane.b32.xlu0 %v739, 72
        %v1812 = vpop.permute.xlu0 %1811
        %v1813 = vsel %vm745, %v1810, 0
        %v1815 = vsel %vm745, %v1812, 0
        %1817 = vmatprep.subr.mxu0 0.0
        %1818 = vmatpush1.xpose.msra.mxu0 0.0
        %1819 = vmatprep.subr.mxu0 0.0
        %1820 = vmatpush1.xpose.msra.mxu0 0.0
        %1821 = vmatprep.subr.mxu0 0.0
        %1822 = vmatpush1.xpose.msra.mxu0 0.0
        %1823 = vmatprep.subr.mxu0 0.0
        %1824 = vmatpush1.xpose.msra.mxu0 0.0
        %1825 = vmatprep.subr.mxu0 0.0
        %1826 = vmatpush1.xpose.msra.mxu0 0.0
        %1827 = vmatprep.subr.mxu0 0.0
        %1828 = vmatpush1.xpose.msra.mxu0 0.0
        %1829 = vmatprep.subr.mxu0 0.0
        %1830 = vmatpush1.xpose.msra.mxu0 0.0
        %1831 = vmatprep.subr.mxu0 0.0
        %1832 = vmatpush1.xpose.msra.mxu0 0.0
        %1833 = vmatprep.subr.mxu0 0.0
        %1834 = vmatpush1.xpose.msra.mxu0 0.0
        %1835 = vmatprep.subr.mxu0 0.0
        %1836 = vmatpush1.xpose.msra.mxu0 0.0
        %1837 = vmatprep.subr.mxu0 0.0
        %1838 = vmatpush1.xpose.msra.mxu0 0.0
        %1839 = vmatprep.subr.mxu0 0.0
        %1840 = vmatpush1.xpose.msra.mxu0 0.0
        %1841 = vmatprep.subr.mxu0 0.0
        %1842 = vmatpush1.xpose.msra.mxu0 0.0
        %1843 = vmatprep.subr.mxu0 0.0
        %1844 = vmatpush1.xpose.msra.mxu0 0.0
        %1845 = vmatprep.subr.mxu0 0.0
        %1846 = vmatpush1.xpose.msra.mxu0 0.0
        %1847 = vmatprep.subr.mxu0 0.0
        %1848 = vmatpush1.xpose.msra.mxu0 %v1815
        %1849 = vmatprep.subr.mxu0 0.0
        %1850 = vmatpush2.xpose.msra.mxu0 0.0
        %1851 = vmatprep.subr.mxu0 0.0
        %1852 = vmatpush2.xpose.msra.mxu0 0.0
        %1853 = vmatprep.subr.mxu0 0.0
        %1854 = vmatpush2.xpose.msra.mxu0 0.0
        %1855 = vmatprep.subr.mxu0 0.0
        %1856 = vmatpush2.xpose.msra.mxu0 0.0
        %1857 = vmatprep.subr.mxu0 0.0
        %1858 = vmatpush2.xpose.msra.mxu0 0.0
        %1859 = vmatprep.subr.mxu0 0.0
        %1860 = vmatpush2.xpose.msra.mxu0 0.0
        %1861 = vmatprep.subr.mxu0 0.0
        %1862 = vmatpush2.xpose.msra.mxu0 0.0
        %1863 = vmatprep.subr.mxu0 0.0
        %1864 = vmatpush2.xpose.msra.mxu0 0.0
        %1865 = vmatprep.subr.mxu0 0.0
        %1866 = vmatpush2.xpose.msra.mxu0 0.0
        %1867 = vmatprep.subr.mxu0 0.0
        %1868 = vmatpush2.xpose.msra.mxu0 0.0
        %1869 = vmatprep.subr.mxu0 0.0
        %1870 = vmatpush2.xpose.msra.mxu0 0.0
        %1871 = vmatprep.subr.mxu0 0.0
        %1872 = vmatpush2.xpose.msra.mxu0 0.0
        %1873 = vmatprep.subr.mxu0 0.0
        %1874 = vmatpush2.xpose.msra.mxu0 0.0
        %1875 = vmatprep.subr.mxu0 0.0
        %1876 = vmatpush2.xpose.msra.mxu0 0.0
        %1877 = vmatprep.subr.mxu0 0.0
        %1878 = vmatpush2.xpose.msra.mxu0 0.0
        %1879 = vmatprep.subr.mxu0 0.0
        %1880 = vmatpush2.xpose.msra.mxu0 0.0
        %1881 = vmatprep.mubr.f32.mxu0 0.0
        %1882 = vmatmul.mubr.f32.gmra.mxu0 %v1813
        %v1883 = vpop.f32.mrf.mxu0
        %v1884 = vadd.f32 0.0, %v1883
        %v1885 = vpop.f32.mrf.mxu0
        %1886 = vdwg.mxu0
        %v1887 = vsel %vm745, %v1806, -inf
        %1888 = vmax.xlane.f32.xlu0 %v1887
        %v1889 = vpop.xlane.xlu0 %1888
        %v1890 = vsel %vm745, %v1884, -inf
        %1891 = vmax.xlane.f32.xlu0 %v1890
        %v1892 = vpop.xlane.xlu0 %1891
        %v1893 = vsub.f32 %v1806, %v1889
        %v1894 = vsub.f32 %v1884, %v1892
        %v1895 = vmul.f32 %v1893, 1.442695
        %v1896 = vpow.pop %v1895
        %v1897 = vmul.f32 %v1894, 1.442695
        %v1898 = vpow.pop %v1897
        %v1899 = vsel %vm745, %v1896, 0.0
        %1900 = vadd.xlane.f32.xlu0 %v1899
        %v1901 = vpop.xlane.xlu0 %1900
        %v1902 = vsel %vm745, %v1898, 0.0
        %1903 = vadd.xlane.f32.xlu0 %v1902
        %v1904 = vpop.xlane.xlu0 %1903
        %v1905 = vrcp.pop %v1901
        %v1906 = vrcp.pop %v1904
        %v1907 = vmul.f32 %v1896, %v1905
        %v1908 = vmul.f32 %v1898, %v1906
        %1909 = vrot.lane.b32.xlu0 %v734, 40
        %v1910 = vpop.permute.xlu0 %1909
        %v1913 = vsel %vm745, %v1907, 0
        %1915 = vmatprep.subr.mxu0 0.0
        %1916 = vmatpush1.msra.mxu0 0.0
        %1917 = vmatprep.subr.mxu0 0.0
        %1918 = vmatpush1.msra.mxu0 0.0
        %1919 = vmatprep.subr.mxu0 0.0
        %1920 = vmatpush1.msra.mxu0 0.0
        %1921 = vmatprep.subr.mxu0 0.0
        %1922 = vmatpush1.msra.mxu0 0.0
        %1923 = vmatprep.subr.mxu0 0.0
        %1924 = vmatpush1.msra.mxu0 0.0
        %1925 = vmatprep.subr.mxu0 0.0
        %1926 = vmatpush1.msra.mxu0 0.0
        %1927 = vmatprep.subr.mxu0 0.0
        %1928 = vmatpush1.msra.mxu0 0.0
        %1929 = vmatprep.subr.mxu0 0.0
        %1930 = vmatpush1.msra.mxu0 0.0
        %1931 = vmatprep.subr.mxu0 0.0
        %1932 = vmatpush1.msra.mxu0 0.0
        %1933 = vmatprep.subr.mxu0 0.0
        %1934 = vmatpush1.msra.mxu0 0.0
        %1935 = vmatprep.subr.mxu0 0.0
        %1936 = vmatpush1.msra.mxu0 0.0
        %1937 = vmatprep.subr.mxu0 0.0
        %1938 = vmatpush1.msra.mxu0 0.0
        %1939 = vmatprep.subr.mxu0 0.0
        %1940 = vmatpush1.msra.mxu0 0.0
        %1941 = vmatprep.subr.mxu0 0.0
        %1942 = vmatpush1.msra.mxu0 0.0
        %1943 = vmatprep.subr.mxu0 0.0
        %1944 = vmatpush1.msra.mxu0 0.0
        %1945 = vmatprep.subr.mxu0 0.0
        %1946 = vmatpush1.msra.mxu0 %v1910
        %1947 = vmatprep.subr.mxu0 0.0
        %1948 = vmatpush2.msra.mxu0 0.0
        %1949 = vmatprep.subr.mxu0 0.0
        %1950 = vmatpush2.msra.mxu0 0.0
        %1951 = vmatprep.subr.mxu0 0.0
        %1952 = vmatpush2.msra.mxu0 0.0
        %1953 = vmatprep.subr.mxu0 0.0
        %1954 = vmatpush2.msra.mxu0 0.0
        %1955 = vmatprep.subr.mxu0 0.0
        %1956 = vmatpush2.msra.mxu0 0.0
        %1957 = vmatprep.subr.mxu0 0.0
        %1958 = vmatpush2.msra.mxu0 0.0
        %1959 = vmatprep.subr.mxu0 0.0
        %1960 = vmatpush2.msra.mxu0 0.0
        %1961 = vmatprep.subr.mxu0 0.0
        %1962 = vmatpush2.msra.mxu0 0.0
        %1963 = vmatprep.subr.mxu0 0.0
        %1964 = vmatpush2.msra.mxu0 0.0
        %1965 = vmatprep.subr.mxu0 0.0
        %1966 = vmatpush2.msra.mxu0 0.0
        %1967 = vmatprep.subr.mxu0 0.0
        %1968 = vmatpush2.msra.mxu0 0.0
        %1969 = vmatprep.subr.mxu0 0.0
        %1970 = vmatpush2.msra.mxu0 0.0
        %1971 = vmatprep.subr.mxu0 0.0
        %1972 = vmatpush2.msra.mxu0 0.0
        %1973 = vmatprep.subr.mxu0 0.0
        %1974 = vmatpush2.msra.mxu0 0.0
        %1975 = vmatprep.subr.mxu0 0.0
        %1976 = vmatpush2.msra.mxu0 0.0
        %1977 = vmatprep.subr.mxu0 0.0
        %1978 = vmatpush2.msra.mxu0 0.0
        %1979 = vmatprep.mubr.f32.mxu0 0.0
        %1980 = vmatmul.mubr.f32.gmra.mxu0 %v1913
        %v1981 = vpop.f32.mrf.mxu0
        %v1982 = vadd.f32 0.0, %v1981
        %v1983 = vpop.f32.mrf.mxu0
        %1984 = vdwg.mxu0
        %1985 = vrot.lane.b32.xlu0 %v739, 40
        %v1986 = vpop.permute.xlu0 %1985
        %v1989 = vsel %vm745, %v1908, 0
        %1991 = vmatprep.subr.mxu0 0.0
        %1992 = vmatpush1.msra.mxu0 0.0
        %1993 = vmatprep.subr.mxu0 0.0
        %1994 = vmatpush1.msra.mxu0 0.0
        %1995 = vmatprep.subr.mxu0 0.0
        %1996 = vmatpush1.msra.mxu0 0.0
        %1997 = vmatprep.subr.mxu0 0.0
        %1998 = vmatpush1.msra.mxu0 0.0
        %1999 = vmatprep.subr.mxu0 0.0
        %2000 = vmatpush1.msra.mxu0 0.0
        %2001 = vmatprep.subr.mxu0 0.0
        %2002 = vmatpush1.msra.mxu0 0.0
        %2003 = vmatprep.subr.mxu0 0.0
        %2004 = vmatpush1.msra.mxu0 0.0
        %2005 = vmatprep.subr.mxu0 0.0
        %2006 = vmatpush1.msra.mxu0 0.0
        %2007 = vmatprep.subr.mxu0 0.0
        %2008 = vmatpush1.msra.mxu0 0.0
        %2009 = vmatprep.subr.mxu0 0.0
        %2010 = vmatpush1.msra.mxu0 0.0
        %2011 = vmatprep.subr.mxu0 0.0
        %2012 = vmatpush1.msra.mxu0 0.0
        %2013 = vmatprep.subr.mxu0 0.0
        %2014 = vmatpush1.msra.mxu0 0.0
        %2015 = vmatprep.subr.mxu0 0.0
        %2016 = vmatpush1.msra.mxu0 0.0
        %2017 = vmatprep.subr.mxu0 0.0
        %2018 = vmatpush1.msra.mxu0 0.0
        %2019 = vmatprep.subr.mxu0 0.0
        %2020 = vmatpush1.msra.mxu0 0.0
        %2021 = vmatprep.subr.mxu0 0.0
        %2022 = vmatpush1.msra.mxu0 %v1986
        %2023 = vmatprep.subr.mxu0 0.0
        %2024 = vmatpush2.msra.mxu0 0.0
        %2025 = vmatprep.subr.mxu0 0.0
        %2026 = vmatpush2.msra.mxu0 0.0
        %2027 = vmatprep.subr.mxu0 0.0
        %2028 = vmatpush2.msra.mxu0 0.0
        %2029 = vmatprep.subr.mxu0 0.0
        %2030 = vmatpush2.msra.mxu0 0.0
        %2031 = vmatprep.subr.mxu0 0.0
        %2032 = vmatpush2.msra.mxu0 0.0
        %2033 = vmatprep.subr.mxu0 0.0
        %2034 = vmatpush2.msra.mxu0 0.0
        %2035 = vmatprep.subr.mxu0 0.0
        %2036 = vmatpush2.msra.mxu0 0.0
        %2037 = vmatprep.subr.mxu0 0.0
        %2038 = vmatpush2.msra.mxu0 0.0
        %2039 = vmatprep.subr.mxu0 0.0
        %2040 = vmatpush2.msra.mxu0 0.0
        %2041 = vmatprep.subr.mxu0 0.0
        %2042 = vmatpush2.msra.mxu0 0.0
        %2043 = vmatprep.subr.mxu0 0.0
        %2044 = vmatpush2.msra.mxu0 0.0
        %2045 = vmatprep.subr.mxu0 0.0
        %2046 = vmatpush2.msra.mxu0 0.0
        %2047 = vmatprep.subr.mxu0 0.0
        %2048 = vmatpush2.msra.mxu0 0.0
        %2049 = vmatprep.subr.mxu0 0.0
        %2050 = vmatpush2.msra.mxu0 0.0
        %2051 = vmatprep.subr.mxu0 0.0
        %2052 = vmatpush2.msra.mxu0 0.0
        %2053 = vmatprep.subr.mxu0 0.0
        %2054 = vmatpush2.msra.mxu0 0.0
        %2055 = vmatprep.mubr.f32.mxu0 0.0
        %2056 = vmatmul.mubr.f32.gmra.mxu0 %v1989
        %v2057 = vpop.f32.mrf.mxu0
        %v2058 = vadd.f32 0.0, %v2057
        %v2059 = vpop.f32.mrf.mxu0
        %2060 = vdwg.mxu0
        %2063 = vrot.lane.b32.xlu0 %v1322, 8
        %v2064 = vpop.permute.xlu0 %2063
        %2065 = vrot.lane.b32.xlu0 %v1398, 8
        %v2066 = vpop.permute.xlu0 %2065
        %2071 = vrot.lane.b32.xlu0 %v1652, 16
        %v2072 = vpop.permute.xlu0 %2071
        %2073 = vrot.lane.b32.xlu0 %v1728, 16
        %v2074 = vpop.permute.xlu0 %2073
        %2079 = vrot.lane.b32.xlu0 %v1982, 24
        %v2080 = vpop.permute.xlu0 %2079
        %2081 = vrot.lane.b32.xlu0 %v2058, 24
        %v2082 = vpop.permute.xlu0 %2081
        %v2085 = vsel %vm745, %v992, %v2064
        %v2086 = vsel %vm745, %v1068, %v2066
        %vm2087 = vcmask 130048
        %v2088 = vsel %vm2087, %v2085, %v2072
        %v2089 = vsel %vm2087, %v2086, %v2074
        %vm2090 = vcmask 195584
        %v2091 = vsel %vm2090, %v2088, %v2080
        %v2092 = vsel %vm2090, %v2089, %v2082
        %v2093 = vld [vmem:[%s573] sm:$0xff]
        %v2094 = vld [vmem:[%s573 + $0x8] sm:$0xff]
        %v2095 = vld [vmem:[%s573 + $0x10] sm:$0xff]
        %v2096 = vld [vmem:[%s573 + $0x18] sm:$0xff]
        %v2098 = vsel %vm613, %v2091, 0
        %v2101 = vsel %vm613, %v2092, 0
        %2103 = vmatprep.subr.mxu0 0.0
        %2104 = vmatpush1.msra.mxu0 0.0
        %2105 = vmatprep.subr.mxu0 0.0
        %2106 = vmatpush1.msra.mxu0 0.0
        %2107 = vmatprep.subr.mxu0 0.0
        %2108 = vmatpush1.msra.mxu0 0.0
        %2109 = vmatprep.subr.mxu0 0.0
        %2110 = vmatpush1.msra.mxu0 0.0
        %2111 = vmatprep.subr.mxu0 0.0
        %2112 = vmatpush1.msra.mxu0 0.0
        %2113 = vmatprep.subr.mxu0 0.0
        %2114 = vmatpush1.msra.mxu0 0.0
        %2115 = vmatprep.subr.mxu0 0.0
        %2116 = vmatpush1.msra.mxu0 0.0
        %2117 = vmatprep.subr.mxu0 0.0
        %2118 = vmatpush1.msra.mxu0 0.0
        %2119 = vmatprep.subr.mxu0 0.0
        %2120 = vmatpush1.msra.mxu0 0.0
        %2121 = vmatprep.subr.mxu0 0.0
        %2122 = vmatpush1.msra.mxu0 0.0
        %2123 = vmatprep.subr.mxu0 0.0
        %2124 = vmatpush1.msra.mxu0 0.0
        %2125 = vmatprep.subr.mxu0 0.0
        %2126 = vmatpush1.msra.mxu0 0.0
        %2127 = vmatprep.subr.mxu0 0.0
        %2128 = vmatpush1.msra.mxu0 %v2096
        %2129 = vmatprep.subr.mxu0 0.0
        %2130 = vmatpush1.msra.mxu0 %v2095
        %2131 = vmatprep.subr.mxu0 0.0
        %2132 = vmatpush1.msra.mxu0 %v2094
        %2133 = vmatprep.subr.mxu0 0.0
        %2134 = vmatpush1.msra.mxu0 %v2093
        %2135 = vmatprep.subr.mxu0 0.0
        %2136 = vmatpush2.msra.mxu0 0.0
        %2137 = vmatprep.subr.mxu0 0.0
        %2138 = vmatpush2.msra.mxu0 0.0
        %2139 = vmatprep.subr.mxu0 0.0
        %2140 = vmatpush2.msra.mxu0 0.0
        %2141 = vmatprep.subr.mxu0 0.0
        %2142 = vmatpush2.msra.mxu0 0.0
        %2143 = vmatprep.subr.mxu0 0.0
        %2144 = vmatpush2.msra.mxu0 0.0
        %2145 = vmatprep.subr.mxu0 0.0
        %2146 = vmatpush2.msra.mxu0 0.0
        %2147 = vmatprep.subr.mxu0 0.0
        %2148 = vmatpush2.msra.mxu0 0.0
        %2149 = vmatprep.subr.mxu0 0.0
        %2150 = vmatpush2.msra.mxu0 0.0
        %2151 = vmatprep.subr.mxu0 0.0
        %2152 = vmatpush2.msra.mxu0 0.0
        %2153 = vmatprep.subr.mxu0 0.0
        %2154 = vmatpush2.msra.mxu0 0.0
        %2155 = vmatprep.subr.mxu0 0.0
        %2156 = vmatpush2.msra.mxu0 0.0
        %2157 = vmatprep.subr.mxu0 0.0
        %2158 = vmatpush2.msra.mxu0 0.0
        %2159 = vmatprep.subr.mxu0 0.0
        %2160 = vmatpush2.msra.mxu0 0.0
        %2161 = vmatprep.subr.mxu0 0.0
        %2162 = vmatpush2.msra.mxu0 0.0
        %2163 = vmatprep.subr.mxu0 0.0
        %2164 = vmatpush2.msra.mxu0 0.0
        %2165 = vmatprep.subr.mxu0 0.0
        %2166 = vmatpush2.msra.mxu0 0.0
        %2167 = vmatprep.mubr.f32.mxu0 0.0
        %2168 = vmatmul.mubr.f32.gmra.mxu0 %v2098
        %v2169 = vpop.f32.mrf.mxu0
        %v2170 = vadd.f32 0.0, %v2169
        %v2171 = vpop.f32.mrf.mxu0
        %2172 = vmatprep.mubr.f32.mxu0 0.0
        %2173 = vmatmul.mubr.f32.gmra.mxu0 %v2101
        %v2174 = vpop.f32.mrf.mxu0
        %v2175 = vadd.f32 0.0, %v2174
        %v2176 = vpop.f32.mrf.mxu0
        %2177 = vdwg.mxu0
        %v2178 = vadd.f32 %v609, %v2170
        %v2179 = vadd.f32 %v610, %v2175
        %v2180 = vld [vmem:[%s576] sm:$0x1]
        %v2182 = vlaneseq
        %v2183 = vshrl.u32 %v2182, 7
        %v2184 = vsub.s32 0, %v2183
        %v2185 = vrot.slane %v2180, %v2184
        %v2187 = vadd.f32 %v2178, %v2185
        %v2188 = vadd.f32 %v2179, %v2185
        %v2189 = vld [vmem:[%s579] sm:$0x1]
        %v2190 = vld [vmem:[%s582] sm:$0x1]
        %v2191 = vsel %vm613, %v2187, 0.0
        %2192 = vadd.xlane.f32.xlu0 %v2191
        %v2193 = vpop.xlane.xlu0 %2192
        %v2194 = vsel %vm613, %v2188, 0.0
        %2195 = vadd.xlane.f32.xlu0 %v2194
        %v2196 = vpop.xlane.xlu0 %2195
        %v2197 = vmul.f32 %v2193, %v620
        %v2198 = vmul.f32 %v2196, %v620
        %v2199 = vsub.f32 %v2187, %v2197
        %v2200 = vsub.f32 %v2188, %v2198
        %v2201 = vmul.f32 %v2199, %v2199
        %v2202 = vmul.f32 %v2200, %v2200
        %v2203 = vsel %vm613, %v2201, 0.0
        %2204 = vadd.xlane.f32.xlu0 %v2203
        %v2205 = vpop.xlane.xlu0 %2204
        %v2206 = vsel %vm613, %v2202, 0.0
        %2207 = vadd.xlane.f32.xlu0 %v2206
        %v2208 = vpop.xlane.xlu0 %2207
        %v2209 = vmul.f32 %v2205, %v620
        %v2210 = vmul.f32 %v2208, %v620
        %v2211 = vadd.f32 %v2209, 1e-05
        %v2212 = vadd.f32 %v2210, 1e-05
        %v2213 = vrsqrt.pop %v2211
        %v2214 = vrsqrt.pop %v2212
        %v2215 = vmul.f32 %v2199, %v2213
        %v2216 = vmul.f32 %v2200, %v2214
        %v2218 = vlaneseq
        %v2219 = vshrl.u32 %v2218, 7
        %v2220 = vsub.s32 0, %v2219
        %v2221 = vrot.slane %v2189, %v2220
        %v2223 = vmul.f32 %v2215, %v2221
        %v2224 = vmul.f32 %v2216, %v2221
        %v2226 = vlaneseq
        %v2227 = vshrl.u32 %v2226, 7
        %v2228 = vsub.s32 0, %v2227
        %v2229 = vrot.slane %v2190, %v2228
        %v2231 = vadd.f32 %v2223, %v2229
        %v2232 = vadd.f32 %v2224, %v2229
        %v2233 = vld [vmem:[%s587] sm:$0xff]
        %v2234 = vld [vmem:[%s587 + $0x8] sm:$0xff]
        %v2235 = vld [vmem:[%s587 + $0x10] sm:$0xff]
        %v2236 = vld [vmem:[%s587 + $0x18] sm:$0xff]
        %v2237 = vld [vmem:[%s590] sm:$0x1]
        %v2239 = vlaneseq
        %v2240 = vshrl.u32 %v2239, 7
        %v2241 = vsub.s32 0, %v2240
        %v2242 = vrot.slane %v2237, %v2241
        %v2245 = vsel %vm613, %v2231, 0
        %v2248 = vsel %vm613, %v2232, 0
        %2250 = vmatprep.subr.mxu0 0.0
        %2251 = vmatpush1.msra.mxu0 0.0
        %2252 = vmatprep.subr.mxu0 0.0
        %2253 = vmatpush1.msra.mxu0 0.0
        %2254 = vmatprep.subr.mxu0 0.0
        %2255 = vmatpush1.msra.mxu0 0.0
        %2256 = vmatprep.subr.mxu0 0.0
        %2257 = vmatpush1.msra.mxu0 0.0
        %2258 = vmatprep.subr.mxu0 0.0
        %2259 = vmatpush1.msra.mxu0 0.0
        %2260 = vmatprep.subr.mxu0 0.0
        %2261 = vmatpush1.msra.mxu0 0.0
        %2262 = vmatprep.subr.mxu0 0.0
        %2263 = vmatpush1.msra.mxu0 0.0
        %2264 = vmatprep.subr.mxu0 0.0
        %2265 = vmatpush1.msra.mxu0 0.0
        %2266 = vmatprep.subr.mxu0 0.0
        %2267 = vmatpush1.msra.mxu0 0.0
        %2268 = vmatprep.subr.mxu0 0.0
        %2269 = vmatpush1.msra.mxu0 0.0
        %2270 = vmatprep.subr.mxu0 0.0
        %2271 = vmatpush1.msra.mxu0 0.0
        %2272 = vmatprep.subr.mxu0 0.0
        %2273 = vmatpush1.msra.mxu0 0.0
        %2274 = vmatprep.subr.mxu0 0.0
        %2275 = vmatpush1.msra.mxu0 %v2236
        %2276 = vmatprep.subr.mxu0 0.0
        %2277 = vmatpush1.msra.mxu0 %v2235
        %2278 = vmatprep.subr.mxu0 0.0
        %2279 = vmatpush1.msra.mxu0 %v2234
        %2280 = vmatprep.subr.mxu0 0.0
        %2281 = vmatpush1.msra.mxu0 %v2233
        %2282 = vmatprep.subr.mxu0 0.0
        %2283 = vmatpush2.msra.mxu0 0.0
        %2284 = vmatprep.subr.mxu0 0.0
        %2285 = vmatpush2.msra.mxu0 0.0
        %2286 = vmatprep.subr.mxu0 0.0
        %2287 = vmatpush2.msra.mxu0 0.0
        %2288 = vmatprep.subr.mxu0 0.0
        %2289 = vmatpush2.msra.mxu0 0.0
        %2290 = vmatprep.subr.mxu0 0.0
        %2291 = vmatpush2.msra.mxu0 0.0
        %2292 = vmatprep.subr.mxu0 0.0
        %2293 = vmatpush2.msra.mxu0 0.0
        %2294 = vmatprep.subr.mxu0 0.0
        %2295 = vmatpush2.msra.mxu0 0.0
        %2296 = vmatprep.subr.mxu0 0.0
        %2297 = vmatpush2.msra.mxu0 0.0
        %2298 = vmatprep.subr.mxu0 0.0
        %2299 = vmatpush2.msra.mxu0 0.0
        %2300 = vmatprep.subr.mxu0 0.0
        %2301 = vmatpush2.msra.mxu0 0.0
        %2302 = vmatprep.subr.mxu0 0.0
        %2303 = vmatpush2.msra.mxu0 0.0
        %2304 = vmatprep.subr.mxu0 0.0
        %2305 = vmatpush2.msra.mxu0 0.0
        %2306 = vmatprep.subr.mxu0 0.0
        %2307 = vmatpush2.msra.mxu0 0.0
        %2308 = vmatprep.subr.mxu0 0.0
        %2309 = vmatpush2.msra.mxu0 0.0
        %2310 = vmatprep.subr.mxu0 0.0
        %2311 = vmatpush2.msra.mxu0 0.0
        %2312 = vmatprep.subr.mxu0 0.0
        %2313 = vmatpush2.msra.mxu0 0.0
        %2314 = vmatprep.mubr.f32.mxu0 0.0
        %2315 = vmatmul.mubr.f32.gmra.mxu0 %v2245
        %v2316 = vpop.f32.mrf.mxu0
        %v2317 = vadd.f32 %v2242, %v2316
        %v2318 = vpop.f32.mrf.mxu0
        %2319 = vmatprep.mubr.f32.mxu0 0.0
        %2320 = vmatmul.mubr.f32.gmra.mxu0 %v2248
        %v2321 = vpop.f32.mrf.mxu0
        %v2322 = vadd.f32 %v2242, %v2321
        %v2323 = vpop.f32.mrf.mxu0
        %2324 = vdwg.mxu0
        %v2325 = vmul.f32 %v2317, 0.5
        %v2326 = vmul.f32 %v2322, 0.5
        %v2327 = vmul.f32 %v2317, 0.70710677
        %v2328 = vmul.f32 %v2322, 0.70710677
        %vm2329 = vcmp.ge.f32.partialorder %v2327, 0.0
        %vm2330 = vcmp.ge.f32.partialorder %v2328, 0.0
        %v2331 = vsel %vm2329, 1.0, -1.0
        %v2332 = vsel %vm2330, 1.0, -1.0
        %v2333 = vand.u32 2147483647, %v2327
        %v2334 = vand.u32 2147483647, %v2328
        %v2335 = vmul.f32 %v2333, 0.3275911
        %v2336 = vmul.f32 %v2334, 0.3275911
        %v2337 = vadd.f32 %v2335, 1.0
        %v2338 = vadd.f32 %v2336, 1.0
        %v2339 = vrcp.pop %v2337
        %v2340 = vrcp.pop %v2338
        %v2341 = vmul.f32 %v2339, 1.0614054
        %v2342 = vmul.f32 %v2340, 1.0614054
        %v2343 = vadd.f32 %v2341, -1.4531521
        %v2344 = vadd.f32 %v2342, -1.4531521
        %v2345 = vmul.f32 %v2343, %v2339
        %v2346 = vmul.f32 %v2344, %v2340
        %v2347 = vadd.f32 %v2345, 1.4214138
        %v2348 = vadd.f32 %v2346, 1.4214138
        %v2349 = vmul.f32 %v2347, %v2339
        %v2350 = vmul.f32 %v2348, %v2340
        %v2351 = vadd.f32 %v2349, -0.28449672
        %v2352 = vadd.f32 %v2350, -0.28449672
        %v2353 = vmul.f32 %v2351, %v2339
        %v2354 = vmul.f32 %v2352, %v2340
        %v2355 = vadd.f32 %v2353, 0.2548296
        %v2356 = vadd.f32 %v2354, 0.2548296
        %v2357 = vmul.f32 %v2355, %v2339
        %v2358 = vmul.f32 %v2356, %v2340
        %v2359 = vsub.f32 0.0, %v2333
        %v2360 = vsub.f32 0.0, %v2334
        %v2361 = vmul.f32 %v2359, %v2333
        %v2362 = vmul.f32 %v2360, %v2334
        %v2363 = vmul.f32 %v2361, 1.442695
        %v2364 = vpow.pop %v2363
        %v2365 = vmul.f32 %v2362, 1.442695
        %v2366 = vpow.pop %v2365
        %v2367 = vmul.f32 %v2357, %v2364
        %v2368 = vmul.f32 %v2358, %v2366
        %v2369 = vsub.f32 1.0, %v2367
        %v2370 = vsub.f32 1.0, %v2368
        %v2371 = vmul.f32 %v2331, %v2369
        %v2372 = vmul.f32 %v2332, %v2370
        %v2373 = vadd.f32 %v2371, 1.0
        %v2374 = vadd.f32 %v2372, 1.0
        %v2375 = vmul.f32 %v2325, %v2373
        %v2376 = vmul.f32 %v2326, %v2374
        %v2377 = vld [vmem:[%s595] sm:$0xff]
        %v2378 = vld [vmem:[%s595 + $0x8] sm:$0xff]
        %v2379 = vld [vmem:[%s595 + $0x10] sm:$0xff]
        %v2380 = vld [vmem:[%s595 + $0x18] sm:$0xff]
        %v2381 = vld [vmem:[%s595 + $0x20] sm:$0xff]
        %v2382 = vld [vmem:[%s595 + $0x28] sm:$0xff]
        %v2383 = vld [vmem:[%s595 + $0x30] sm:$0xff]
        %v2384 = vld [vmem:[%s595 + $0x38] sm:$0xff]
        %v2385 = vld [vmem:[%s598] sm:$0x1]
        %v2387 = vlaneseq
        %v2388 = vshrl.u32 %v2387, 7
        %v2389 = vsub.s32 0, %v2388
        %v2390 = vrot.slane %v2385, %v2389
        %vm2392 = vcmask 523264
        %v2394 = vsel %vm2392, %v2375, 0
        %v2397 = vsel %vm2392, %v2376, 0
        %2399 = vmatprep.subr.mxu0 0.0
        %2400 = vmatpush1.msra.mxu0 0.0
        %2401 = vmatprep.subr.mxu0 0.0
        %2402 = vmatpush1.msra.mxu0 0.0
        %2403 = vmatprep.subr.mxu0 0.0
        %2404 = vmatpush1.msra.mxu0 0.0
        %2405 = vmatprep.subr.mxu0 0.0
        %2406 = vmatpush1.msra.mxu0 0.0
        %2407 = vmatprep.subr.mxu0 0.0
        %2408 = vmatpush1.msra.mxu0 0.0
        %2409 = vmatprep.subr.mxu0 0.0
        %2410 = vmatpush1.msra.mxu0 0.0
        %2411 = vmatprep.subr.mxu0 0.0
        %2412 = vmatpush1.msra.mxu0 0.0
        %2413 = vmatprep.subr.mxu0 0.0
        %2414 = vmatpush1.msra.mxu0 0.0
        %2415 = vmatprep.subr.mxu0 0.0
        %2416 = vmatpush1.msra.mxu0 %v2384
        %2417 = vmatprep.subr.mxu0 0.0
        %2418 = vmatpush1.msra.mxu0 %v2383
        %2419 = vmatprep.subr.mxu0 0.0
        %2420 = vmatpush1.msra.mxu0 %v2382
        %2421 = vmatprep.subr.mxu0 0.0
        %2422 = vmatpush1.msra.mxu0 %v2381
        %2423 = vmatprep.subr.mxu0 0.0
        %2424 = vmatpush1.msra.mxu0 %v2380
        %2425 = vmatprep.subr.mxu0 0.0
        %2426 = vmatpush1.msra.mxu0 %v2379
        %2427 = vmatprep.subr.mxu0 0.0
        %2428 = vmatpush1.msra.mxu0 %v2378
        %2429 = vmatprep.subr.mxu0 0.0
        %2430 = vmatpush1.msra.mxu0 %v2377
        %2431 = vmatprep.subr.mxu0 0.0
        %2432 = vmatpush2.msra.mxu0 0.0
        %2433 = vmatprep.subr.mxu0 0.0
        %2434 = vmatpush2.msra.mxu0 0.0
        %2435 = vmatprep.subr.mxu0 0.0
        %2436 = vmatpush2.msra.mxu0 0.0
        %2437 = vmatprep.subr.mxu0 0.0
        %2438 = vmatpush2.msra.mxu0 0.0
        %2439 = vmatprep.subr.mxu0 0.0
        %2440 = vmatpush2.msra.mxu0 0.0
        %2441 = vmatprep.subr.mxu0 0.0
        %2442 = vmatpush2.msra.mxu0 0.0
        %2443 = vmatprep.subr.mxu0 0.0
        %2444 = vmatpush2.msra.mxu0 0.0
        %2445 = vmatprep.subr.mxu0 0.0
        %2446 = vmatpush2.msra.mxu0 0.0
        %2447 = vmatprep.subr.mxu0 0.0
        %2448 = vmatpush2.msra.mxu0 0.0
        %2449 = vmatprep.subr.mxu0 0.0
        %2450 = vmatpush2.msra.mxu0 0.0
        %2451 = vmatprep.subr.mxu0 0.0
        %2452 = vmatpush2.msra.mxu0 0.0
        %2453 = vmatprep.subr.mxu0 0.0
        %2454 = vmatpush2.msra.mxu0 0.0
        %2455 = vmatprep.subr.mxu0 0.0
        %2456 = vmatpush2.msra.mxu0 0.0
        %2457 = vmatprep.subr.mxu0 0.0
        %2458 = vmatpush2.msra.mxu0 0.0
        %2459 = vmatprep.subr.mxu0 0.0
        %2460 = vmatpush2.msra.mxu0 0.0
        %2461 = vmatprep.subr.mxu0 0.0
        %2462 = vmatpush2.msra.mxu0 0.0
        %2463 = vmatprep.mubr.f32.mxu0 0.0
        %2464 = vmatmul.mubr.f32.gmra.mxu0 %v2394
        %v2465 = vpop.f32.mrf.mxu0
        %v2466 = vadd.f32 %v2390, %v2465
        %v2467 = vpop.f32.mrf.mxu0
        %2468 = vmatprep.mubr.f32.mxu0 0.0
        %2469 = vmatmul.mubr.f32.gmra.mxu0 %v2397
        %v2470 = vpop.f32.mrf.mxu0
        %v2471 = vadd.f32 %v2390, %v2470
        %v2472 = vpop.f32.mrf.mxu0
        %2473 = vdwg.mxu0
        %v2474 = vadd.f32 %v2187, %v2466
        %v2475 = vadd.f32 %v2188, %v2471
        %2476 = vst.msk [vmem:[#allocation5] sm:$0xff] %vm613, %v2474
        %2477 = vst.msk [vmem:[#allocation5 + $0x8] sm:$0xff] %vm613, %v2475
        // Predicated region
        $region77: #{tpu_custom_call.1} parent=67 // pred_check
          %p2478 = pneg %p367
        $region78: #{tpu_custom_call.1} parent=67 // pred_check_branch
          %2480 = sbr.rel (%p2478) target = $region80
        $region79: #{tpu_custom_call.1} parent=67 // pred_region
          %s2481 = smul.u32 2, %s29
          %s2483 = ssub.s32 256, 256
          %2484 = vsyncadd [#allocation4], %s2483
          %s2485 = smul.addr %s2481, 128
          %s2486 = scalar_lea.hbm %s12, %s2485
          %s2487 = sshll.u32 [#allocation5], 4
          %s2488 = int_to_ptr.vmem [resolvable:$true] %s2487
          %2493 = dma.vmem_to_hbm [thread:$0]  %s2488, 256, %s2486, [#allocation4], 128, 128, 8
        $region80: #{tpu_custom_call.1} parent=67 // pred_fallthru
          _
        // Predicated region
        $region81: #{tpu_custom_call.1} parent=67 // pred_check
          %p2494 = pneg %p367
        $region82: #{tpu_custom_call.1} parent=67 // pred_check_branch
          %2496 = sbr.rel (%p2494) target = $region84
        $region83: #{tpu_custom_call.1} parent=67 // pred_region
          %2497 = dma.done [#allocation4], 256
        $region84: #{tpu_custom_call.1} parent=67 // pred_fallthru
          _
      $region68: #{tpu_custom_call.1} parent=5 // pred_fallthru
        _
      %p2498 = scmp.le.s32.totalorder 2, %s20
      // Predicated region
      $region85: #{tpu_custom_call.1} parent=5 // pred_check
        %p2499 = pneg %p2498
      $region86: #{tpu_custom_call.1} parent=5 // pred_check_branch
        %2501 = sbr.rel (%p2499) target = $region88
      $region87: #{tpu_custom_call.1} parent=5 // pred_region
        %s2502 = ssub.s32 %s20, 2
      $region88: #{tpu_custom_call.1} parent=5 // pred_fallthru
        _
    $region6: #{tpu_custom_call.1} parent=1 // loop_footer
      %s24 = sadd.s32 1, %s20
    $region7: #{tpu_custom_call.1} parent=1 // loop_footer_branch
      %19 = sbr.rel target = $region3
    $region8: #{tpu_custom_call.1} parent=1 // loop_exit
      _
    %2503 = vsyncpa [#allocation3], 1
    %s2504 = scalar_lea.sflag [#allocation3], 1
    %2505 = vsyncpa %s2504, 1
    %2506 = vsyncpa [#allocation4], 1
    %s2507 = scalar_lea.sflag [#allocation4], 1
    %2508 = vsyncpa %s2507, 1

</llo_original>
